<compile_context>
chip_gen: v5e
topology: v5e:2x2
jax: 0.10.0
libtpu: 0.0.40
codegen_flags: <defaults>
</compile_context>

<pallas_src>
import functools

import jax
import jax.numpy as jnp
import numpy as np
from jax.experimental import pallas as pl
from jax.experimental.pallas import tpu as pltpu

_MIB = 1024 * 1024


def _dino_loss_kernel(student_ref, teacher_ref, center_ref,
                      loss_part_ref, tsum_part_ref,
                      q_scr, tsum_scr, dot_scr, logz_scr,
                      *, teacher_temp, student_temp):
    bi = pl.program_id(1)          # batch-tile index within this core group
    vi = pl.program_id(2)          # student-crop index (innermost)
    nb = pl.num_programs(1)
    nv = pl.num_programs(2)

    # ---- init this core group's accumulators on its first grid step ----
    @pl.when((bi == 0) & (vi == 0))
    def _init():
        tsum_scr[...] = jnp.zeros_like(tsum_scr)
        dot_scr[...] = jnp.zeros_like(dot_scr)
        logz_scr[...] = jnp.zeros_like(logz_scr)

    # ---- once per batch tile: teacher softmax -> scratch, teacher row-sum ----
    @pl.when(vi == 0)
    def _teacher():
        c = center_ref[...].astype(jnp.float32)                   # (1, D)
        inv_tt = jnp.float32(1.0 / teacher_temp)
        t0 = teacher_ref[0].astype(jnp.float32)                   # (TB, D)
        t1 = teacher_ref[1].astype(jnp.float32)                   # (TB, D)
        tsum_scr[...] += jnp.sum(t0 + t1, axis=0, keepdims=True)  # per-lane partial
        qs = []
        for tg in (t0, t1):
            tz = (tg - c) * inv_tt
            tz = tz - jnp.max(tz, axis=-1, keepdims=True)
            te = jnp.exp(tz)
            # Per-row exact reciprocal (TB values), broadcast-multiplied, instead of
            # a full (TB, D) divide.  Exact (NOT pl.reciprocal(approx=True)): the
            # deferred-normalization algebra below relies on sum_d q == 1.
            inv_z = 1.0 / jnp.sum(te, axis=-1, keepdims=True)
            qs.append(te * inv_z)
        q_scr[0] = qs[0]
        q_scr[1] = qs[1]
        q_scr[2] = qs[0] + qs[1]          # qsum: shared by all local-crop steps

    # ---- every step: student log-softmax pieces ----
    s = student_ref[...].astype(jnp.float32)                      # (TB, D)
    sz = s * jnp.float32(1.0 / student_temp)
    szc = sz - jnp.max(sz, axis=-1, keepdims=True)
    logz = jnp.log(jnp.sum(jnp.exp(szc), axis=-1, keepdims=True))  # (TB, 1)

    # Per-step contribution (deferred softmax normalization; sum_d q == 1):
    #   vi >= 2 (local crop): pairs with both globals  -> 2*sum_rows(logz) - sum((q0+q1)*szc)
    #   vi == 0 (global 0):   pairs with global 1 only ->   sum_rows(logz) - sum(q1*szc)
    #   vi == 1 (global 1):   pairs with global 0 only ->   sum_rows(logz) - sum(q0*szc)
    # Accumulated as per-lane (dot_scr) and per-row (logz_scr) partials; the final
    # reduce-to-scalar happens once, in the finalize block.
    @pl.when(vi >= 2)
    def _local_crop():
        dot_scr[...] += jnp.sum(q_scr[2] * szc, axis=0, keepdims=True)
        logz_scr[...] += 2.0 * logz

    @pl.when(vi == 0)
    def _global_crop0():
        dot_scr[...] += jnp.sum(q_scr[1] * szc, axis=0, keepdims=True)
        logz_scr[...] += logz

    @pl.when(vi == 1)
    def _global_crop1():
        dot_scr[...] += jnp.sum(q_scr[0] * szc, axis=0, keepdims=True)
        logz_scr[...] += logz

    # ---- finalize this core group's partial outputs on its last grid step ----
    @pl.when((bi == nb - 1) & (vi == nv - 1))
    def _finalize():
        loss_sum = jnp.sum(logz_scr[...]) - jnp.sum(dot_scr[...])
        loss_part_ref[...] = jnp.full((1, 1), loss_sum, dtype=jnp.float32)
        tsum_part_ref[...] = tsum_scr[...]


def _vmem_capacity_bytes():
    try:
        cap = int(pltpu.get_tpu_info().vmem_capacity_bytes)
        if cap > 0:
            return cap
    except Exception:
        pass
    return 64 * _MIB    # conservative fallback (v7x per-TC size)


def _vmem_estimate_bytes(tb, feat_dim, in_itemsize):
    """Per-step VMEM working-set estimate for batch tile `tb`."""
    # student tile (x2 bufs) + teacher tile (2 crops, x2 bufs) in input dtype
    io = (2 * tb * feat_dim + 4 * tb * feat_dim) * in_itemsize
    # q scratch (q0, q1, qsum) + lane/row accumulators + f32 temporaries
    scr = (3 * tb * feat_dim + 2 * feat_dim) * 4 + max(tb, 8) * 128 * 4
    tmp = 5 * tb * feat_dim * 4
    fixed = 4 * feat_dim * 4 + (1 << 16)     # center (x2), outputs, slack
    return io + scr + tmp + fixed


def _pick_batch_tile(batch, feat_dim, in_itemsize, budget_bytes):
    """Largest legal batch tile whose working set fits `budget_bytes`."""
    align = 16 if in_itemsize < 4 else 8       # bf16 sublane packing wants 16
    candidates = [tb for tb in range(batch, 0, -1)
                  if batch % tb == 0 and (tb == batch or tb % align == 0)]
    for tb in candidates:                       # descending: biggest tile first
        if _vmem_estimate_bytes(tb, feat_dim, in_itemsize) <= budget_bytes:
            return tb
    return candidates[-1]                       # smallest legal; caller validates


def dino_loss(student_output, teacher_output, center, *, ncrops, batch,
              teacher_temp, student_temp=0.1, center_momentum=0.9,
              batch_tile=None, student_buffers=None):
    """Returns (loss, new_center), matching DINOLoss.forward + update_center."""
    n_student, out_dim = student_output.shape
    assert n_student == ncrops * batch, "student rows must be ncrops * batch"
    assert teacher_output.shape == (2 * batch, out_dim), \
        "teacher_output must hold exactly 2 global crops of `batch` rows each"
    assert center.shape == (1, out_dim)

    # (crops, batch, D) so one BlockSpec addresses per-crop batch tiles.
    s3 = student_output.reshape(ncrops, batch, out_dim)
    t3 = teacher_output.reshape(2, batch, out_dim)

    itemsize = student_output.dtype.itemsize
    vmem_cap = _vmem_capacity_bytes()
    # Request headroom: <= cap-16MiB and never above 100 MiB (v7x: ~48 MiB).
    vmem_ceiling = min(vmem_cap - 16 * _MIB, 100 * _MIB)
    tile_budget = int(0.85 * vmem_ceiling)

    if batch_tile is None:
        tb = _pick_batch_tile(batch, out_dim, itemsize, tile_budget)
    else:
        tb = int(batch_tile)
    align = 16 if itemsize < 4 else 8
    if batch % tb != 0 or not (tb == batch or tb % align == 0):
        raise ValueError(f"batch_tile={tb} must divide batch={batch} and be "
                         f"{align}-aligned (or equal to batch)")
    est = _vmem_estimate_bytes(tb, out_dim, itemsize)
    if est > vmem_ceiling:
        raise ValueError(
            f"smallest legal batch tile ({tb}) needs ~{est / _MIB:.1f} MiB VMEM "
            f"> ceiling {vmem_ceiling / _MIB:.1f} MiB; pad `batch` to a multiple "
            f"of {align} so smaller tiles become legal")

    nb = batch // tb
    # Split batch tiles across TensorCores (v7x megacore) when possible; on 1-TC
    # chips the parallel axis is just a sequential loop.
    num_groups = 2 if (nb >= 2 and nb % 2 == 0) else 1
    nb_per = nb // num_groups

    # Matches the PyTorch loop structure (robust even for ncrops < 2 globals).
    n_terms = sum(1 for iq in range(2) for v in range(ncrops) if v != iq)

    vmem_limit = int(min(vmem_ceiling, max(32 * _MIB, int(1.25 * est) + 4 * _MIB)))

    kernel = functools.partial(
        _dino_loss_kernel,
        teacher_temp=float(teacher_temp),
        student_temp=float(student_temp),
    )

    # Optional deeper buffering of the streamed student tensor (v5e knob).
    student_kwargs = {}
    if student_buffers is not None:
        student_kwargs = dict(pipeline_mode=pl.Buffered(int(student_buffers)))

    in_specs = [
        # student: one crop's batch tile per grid step (crop dim squeezed)
        pl.BlockSpec((None, tb, out_dim),
                     lambda ci, bi, vi: (vi, ci * nb_per + bi, 0),
                     **student_kwargs),
        # teacher: both global crops of this batch tile; index_map is independent
        # of the crop axis -> tile stays VMEM-resident, no re-DMA per crop.
        pl.BlockSpec((2, tb, out_dim),
                     lambda ci, bi, vi: (0, ci * nb_per + bi, 0)),
        # center: resident for the whole kernel
        pl.BlockSpec((1, out_dim), lambda ci, bi, vi: (0, 0)),
    ]
    out_specs = (
        pl.BlockSpec((None, 1, 1), lambda ci, bi, vi: (ci, 0, 0)),        # loss partial
        pl.BlockSpec((None, 1, out_dim), lambda ci, bi, vi: (ci, 0, 0)),  # tsum partial
    )
    out_shape = (
        jax.ShapeDtypeStruct((num_groups, 1, 1), jnp.float32),
        jax.ShapeDtypeStruct((num_groups, 1, out_dim), jnp.float32),
    )
    scratch_shapes = [
        pltpu.VMEM((3, tb, out_dim), jnp.float32),   # q0, q1, q0+q1 (current tile)
        pltpu.VMEM((1, out_dim), jnp.float32),       # teacher row-sum partial (per lane)
        pltpu.VMEM((1, out_dim), jnp.float32),       # sum(q_sel*szc) partial (per lane)
        pltpu.VMEM((tb, 1), jnp.float32),            # a*logz partial (per row)
    ]

    loss_parts, tsum_parts = pl.pallas_call(
        kernel,
        grid=(num_groups, nb_per, ncrops),
        in_specs=in_specs,
        out_specs=out_specs,
        out_shape=out_shape,
        scratch_shapes=scratch_shapes,
        compiler_params=pltpu.CompilerParams(
            dimension_semantics=("parallel", "arbitrary", "arbitrary"),
            vmem_limit_bytes=vmem_limit,
        ),
    )(s3, t3, center)

    # Tiny JAX epilogue: combine per-core-group partials, normalize, EMA center.
    loss = jnp.sum(loss_parts) * (1.0 / (batch * n_terms))
    batch_center = jnp.sum(tsum_parts, axis=0) * (1.0 / (2 * batch))      # (1, D)
    new_center = (center.astype(jnp.float32) * center_momentum
                  + batch_center * (1.0 - center_momentum))
    return loss, new_center


def _reference(student_output, teacher_output, center, *, ncrops, batch,
               teacher_temp, student_temp, center_momentum):
    """Pure-JAX reference mirroring the PyTorch forward."""
    s = student_output.astype(jnp.float32) / student_temp
    t = (teacher_output.astype(jnp.float32) - center) / teacher_temp
    q_all = jax.nn.softmax(t, axis=-1)
    logp_all = jax.nn.log_softmax(s, axis=-1)
    total, n_terms = 0.0, 0
    for iq in range(2):
        q = q_all[iq * batch:(iq + 1) * batch]
        for v in range(ncrops):
            if v == iq:
                continue
            lp = logp_all[v * batch:(v + 1) * batch]
            total = total + jnp.mean(jnp.sum(-q * lp, axis=-1))
            n_terms += 1
    loss = total / n_terms
    bc = jnp.sum(teacher_output.astype(jnp.float32), axis=0, keepdims=True) \
        / teacher_output.shape[0]
    new_center = center * center_momentum + bc * (1.0 - center_momentum)
    return loss, new_center


if __name__ == "__main__":
    # Module hyperparameters (deterministic, in-script). out_dim is a multiple of
    # 128 so vregs/outputs stay lane-dense (real DINO uses up to 65536).
    out_dim = 256
    ncrops = 4
    batch = 32
    warmup_teacher_temp = 0.04
    teacher_temp = 0.07
    warmup_teacher_temp_epochs = 3
    nepochs = 10
    student_temp = 0.1
    center_momentum = 0.9
    epoch = 1  # static python int (schedule lookup is host-side)

    teacher_temp_schedule = np.concatenate((
        np.linspace(warmup_teacher_temp, teacher_temp, warmup_teacher_temp_epochs),
        np.ones(nepochs - warmup_teacher_temp_epochs) * teacher_temp,
    ))
    temp = float(teacher_temp_schedule[epoch])

    key = jax.random.PRNGKey(0)
    k1, k2 = jax.random.split(key)
    # bf16 HBM inputs (recommended: halves streamed DMA bytes); in-kernel math is f32.
    student_output = jax.random.normal(
        k1, (ncrops * batch, out_dim), dtype=jnp.float32).astype(jnp.bfloat16)
    teacher_output = jax.random.normal(
        k2, (2 * batch, out_dim), dtype=jnp.float32).astype(jnp.bfloat16)
    center = jnp.zeros((1, out_dim), dtype=jnp.float32)  # register_buffer init

    ref_loss, ref_center = _reference(
        student_output, teacher_output, center,
        ncrops=ncrops, batch=batch,
        teacher_temp=temp, student_temp=student_temp,
        center_momentum=center_momentum,
    )

    # Two configs: auto tile (single batch tile), and forced multi-tile which also
    # exercises the 2-group (megacore-split) partial-output path.
    for bt in (None, 16):
        loss, new_center = dino_loss(
            student_output, teacher_output, center,
            ncrops=ncrops, batch=batch,
            teacher_temp=temp, student_temp=student_temp,
            center_momentum=center_momentum,
            batch_tile=bt,
        )
        jax.block_until_ready((loss, new_center))
        # Slightly loose loss tolerance: the kernel uses the (equivalent) deferred
        # softmax-normalization algebra, which changes f32 summation order.
        assert np.allclose(np.asarray(loss), np.asarray(ref_loss),
                           rtol=1e-4, atol=1e-4), (bt, float(loss), float(ref_loss))
        assert np.allclose(np.asarray(new_center), np.asarray(ref_center),
                           rtol=1e-5, atol=1e-5), bt

    print("KERNEL_OK")
</pallas_src>

<mosaic_0001>
module attributes {stable_mosaic.version = 11 : i64} {
  func.func @_dino_loss_kernel(%arg0: i32, %arg1: i32, %arg2: i32, %arg3: memref<1x32x256xbf16, #tpu.memory_space<vmem>>, %arg4: memref<2x32x256xbf16, #tpu.memory_space<vmem>>, %arg5: memref<1x256xf32, #tpu.memory_space<vmem>>, %arg6: memref<1x1x1xf32, #tpu.memory_space<vmem>>, %arg7: memref<1x1x256xf32, #tpu.memory_space<vmem>>, %arg8: memref<3x32x256xf32, #tpu.memory_space<vmem>>, %arg9: memref<1x256xf32, #tpu.memory_space<vmem>>, %arg10: memref<1x256xf32, #tpu.memory_space<vmem>>, %arg11: memref<32x1xf32, #tpu.memory_space<vmem>>) attributes {dimension_semantics = [#tpu.dimension_semantics<parallel>, #tpu.dimension_semantics<arbitrary>, #tpu.dimension_semantics<arbitrary>], iteration_bounds = array<i64: 1, 1, 4>, scalar_prefetch = 0 : i64, scratch_operands = 4 : i64, tpu.core_type = #tpu.core_type<tc>, window_params = [{transform_indices = @transform_0, window_bounds = array<i64: 1, 32, 256>}, {transform_indices = @transform_1, window_bounds = array<i64: 2, 32, 256>}, {pipeline_mode = #tpu.pipeline_mode<synchronous>, transform_indices = @transform_2, window_bounds = array<i64: 1, 256>}, {transform_indices = @transform_3, window_bounds = array<i64: 1, 1, 1>}, {transform_indices = @transform_4, window_bounds = array<i64: 1, 1, 256>}]} {
    %c0_i32 = arith.constant 0 : i32
    %0 = arith.cmpi eq, %arg1, %c0_i32 : i32
    %c0_i32_0 = arith.constant 0 : i32
    %1 = arith.cmpi eq, %arg2, %c0_i32_0 : i32
    %2 = arith.andi %0, %1 : i1
    %3 = arith.extui %2 : i1 to i32
    %c0_i32_1 = arith.constant 0 : i32
    %4 = arith.cmpi ne, %3, %c0_i32_1 : i32
    scf.if %4 {
      %cst_14 = arith.constant 0.000000e+00 : f32
      %35 = vector.broadcast %cst_14 : f32 to vector<1x256xf32>
      %c0_15 = arith.constant 0 : index
      %c0_16 = arith.constant 0 : index
      %36 = vector.load %arg9[%c0_15, %c0_16] : memref<1x256xf32, #tpu.memory_space<vmem>>, vector<1x256xf32>
      tpu.vector_store %arg9[%c0_15, %c0_16], %35 {strides = array<i32>} : memref<1x256xf32, #tpu.memory_space<vmem>>, vector<1x256xf32>,
      %cst_17 = arith.constant 0.000000e+00 : f32
      %37 = vector.broadcast %cst_17 : f32 to vector<1x256xf32>
      %c0_18 = arith.constant 0 : index
      %c0_19 = arith.constant 0 : index
      %38 = vector.load %arg10[%c0_18, %c0_19] : memref<1x256xf32, #tpu.memory_space<vmem>>, vector<1x256xf32>
      tpu.vector_store %arg10[%c0_18, %c0_19], %37 {strides = array<i32>} : memref<1x256xf32, #tpu.memory_space<vmem>>, vector<1x256xf32>,
      %cst_20 = arith.constant 0.000000e+00 : f32
      %39 = vector.broadcast %cst_20 : f32 to vector<32x1xf32>
      %c0_21 = arith.constant 0 : index
      %c0_22 = arith.constant 0 : index
      %40 = vector.load %arg11[%c0_21, %c0_22] : memref<32x1xf32, #tpu.memory_space<vmem>>, vector<32x1xf32>
      tpu.vector_store %arg11[%c0_21, %c0_22], %39 {strides = array<i32>} : memref<32x1xf32, #tpu.memory_space<vmem>>, vector<32x1xf32>,
    } else {
    }
    %c0_i32_2 = arith.constant 0 : i32
    %5 = arith.cmpi eq, %arg2, %c0_i32_2 : i32
    %6 = arith.extui %5 : i1 to i32
    %c0_i32_3 = arith.constant 0 : i32
    %7 = arith.cmpi ne, %6, %c0_i32_3 : i32
    scf.if %7 {
      %c0_14 = arith.constant 0 : index
      %c0_15 = arith.constant 0 : index
      %35 = vector.load %arg5[%c0_14, %c0_15] : memref<1x256xf32, #tpu.memory_space<vmem>>, vector<1x256xf32>
      %c0_16 = arith.constant 0 : index
      %c0_17 = arith.constant 0 : index
      %c0_18 = arith.constant 0 : index
      %36 = vector.load %arg4[%c0_16, %c0_17, %c0_18] : memref<2x32x256xbf16, #tpu.memory_space<vmem>>, vector<1x32x256xbf16>
      %37 = vector.shape_cast %36 : vector<1x32x256xbf16> to vector<32x256xbf16>
      %38 = arith.extf %37 : vector<32x256xbf16> to vector<32x256xf32>
      %c1 = arith.constant 1 : index
      %c0_19 = arith.constant 0 : index
      %c0_20 = arith.constant 0 : index
      %39 = vector.load %arg4[%c1, %c0_19, %c0_20] : memref<2x32x256xbf16, #tpu.memory_space<vmem>>, vector<1x32x256xbf16>
      %40 = vector.shape_cast %39 : vector<1x32x256xbf16> to vector<32x256xbf16>
      %41 = arith.extf %40 : vector<32x256xbf16> to vector<32x256xf32>
      %c0_21 = arith.constant 0 : index
      %c0_22 = arith.constant 0 : index
      %42 = vector.load %arg9[%c0_21, %c0_22] : memref<1x256xf32, #tpu.memory_space<vmem>>, vector<1x256xf32>
      %43 = arith.addf %38, %41 : vector<32x256xf32>
      %cst_23 = arith.constant dense<0.000000e+00> : vector<256xf32>
      %44 = vector.multi_reduction <add>, %43, %cst_23 [0] : vector<32x256xf32> to vector<256xf32>
      %45 = vector.shape_cast %44 : vector<256xf32> to vector<1x256xf32>
      %46 = arith.addf %42, %45 : vector<1x256xf32>
      %c0_24 = arith.constant 0 : index
      %c0_25 = arith.constant 0 : index
      %47 = vector.load %arg9[%c0_24, %c0_25] : memref<1x256xf32, #tpu.memory_space<vmem>>, vector<1x256xf32>
      tpu.vector_store %arg9[%c0_24, %c0_25], %46 {strides = array<i32>} : memref<1x256xf32, #tpu.memory_space<vmem>>, vector<1x256xf32>,
      %48 = vector.broadcast %35 : vector<1x256xf32> to vector<32x256xf32>
      %49 = arith.subf %38, %48 : vector<32x256xf32>
      %cst_26 = arith.constant 18.181818 : f32
      %50 = vector.broadcast %cst_26 : f32 to vector<32x256xf32>
      %51 = arith.mulf %49, %50 : vector<32x256xf32>
      %cst_27 = arith.constant dense<0xFF800000> : vector<32xf32>
      %52 = vector.multi_reduction <maximumf>, %51, %cst_27 [1] : vector<32x256xf32> to vector<32xf32>
      %53 = vector.shape_cast %52 : vector<32xf32> to vector<32x1xf32>
      %54 = vector.broadcast %53 : vector<32x1xf32> to vector<32x256xf32>
      %55 = arith.subf %51, %54 : vector<32x256xf32>
      %56 = math.exp %55 : vector<32x256xf32>
      %cst_28 = arith.constant dense<0.000000e+00> : vector<32xf32>
      %57 = vector.multi_reduction <add>, %56, %cst_28 [1] : vector<32x256xf32> to vector<32xf32>
      %58 = vector.shape_cast %57 : vector<32xf32> to vector<32x1xf32>
      %cst_29 = arith.constant 1.000000e+00 : f32
      %59 = vector.broadcast %cst_29 : f32 to vector<32x1xf32>
      %60 = arith.divf %59, %58 : vector<32x1xf32>
      %61 = vector.broadcast %60 : vector<32x1xf32> to vector<32x256xf32>
      %62 = arith.mulf %56, %61 : vector<32x256xf32>
      %63 = vector.broadcast %35 : vector<1x256xf32> to vector<32x256xf32>
      %64 = arith.subf %41, %63 : vector<32x256xf32>
      %cst_30 = arith.constant 18.181818 : f32
      %65 = vector.broadcast %cst_30 : f32 to vector<32x256xf32>
      %66 = arith.mulf %64, %65 : vector<32x256xf32>
      %cst_31 = arith.constant dense<0xFF800000> : vector<32xf32>
      %67 = vector.multi_reduction <maximumf>, %66, %cst_31 [1] : vector<32x256xf32> to vector<32xf32>
      %68 = vector.shape_cast %67 : vector<32xf32> to vector<32x1xf32>
      %69 = vector.broadcast %68 : vector<32x1xf32> to vector<32x256xf32>
      %70 = arith.subf %66, %69 : vector<32x256xf32>
      %71 = math.exp %70 : vector<32x256xf32>
      %cst_32 = arith.constant dense<0.000000e+00> : vector<32xf32>
      %72 = vector.multi_reduction <add>, %71, %cst_32 [1] : vector<32x256xf32> to vector<32xf32>
      %73 = vector.shape_cast %72 : vector<32xf32> to vector<32x1xf32>
      %cst_33 = arith.constant 1.000000e+00 : f32
      %74 = vector.broadcast %cst_33 : f32 to vector<32x1xf32>
      %75 = arith.divf %74, %73 : vector<32x1xf32>
      %76 = vector.broadcast %75 : vector<32x1xf32> to vector<32x256xf32>
      %77 = arith.mulf %71, %76 : vector<32x256xf32>
      %c0_34 = arith.constant 0 : index
      %c0_35 = arith.constant 0 : index
      %c0_36 = arith.constant 0 : index
      %78 = vector.load %arg8[%c0_34, %c0_35, %c0_36] : memref<3x32x256xf32, #tpu.memory_space<vmem>>, vector<1x32x256xf32>
      %79 = vector.shape_cast %78 : vector<1x32x256xf32> to vector<32x256xf32>
      %80 = vector.shape_cast %62 : vector<32x256xf32> to vector<1x32x256xf32>
      tpu.vector_store %arg8[%c0_34, %c0_35, %c0_36], %80 {strides = array<i32>} : memref<3x32x256xf32, #tpu.memory_space<vmem>>, vector<1x32x256xf32>,
      %c1_37 = arith.constant 1 : index
      %c0_38 = arith.constant 0 : index
      %c0_39 = arith.constant 0 : index
      %81 = vector.load %arg8[%c1_37, %c0_38, %c0_39] : memref<3x32x256xf32, #tpu.memory_space<vmem>>, vector<1x32x256xf32>
      %82 = vector.shape_cast %81 : vector<1x32x256xf32> to vector<32x256xf32>
      %83 = vector.shape_cast %77 : vector<32x256xf32> to vector<1x32x256xf32>
      tpu.vector_store %arg8[%c1_37, %c0_38, %c0_39], %83 {strides = array<i32>} : memref<3x32x256xf32, #tpu.memory_space<vmem>>, vector<1x32x256xf32>,
      %84 = arith.addf %62, %77 : vector<32x256xf32>
      %c2 = arith.constant 2 : index
      %c0_40 = arith.constant 0 : index
      %c0_41 = arith.constant 0 : index
      %85 = vector.load %arg8[%c2, %c0_40, %c0_41] : memref<3x32x256xf32, #tpu.memory_space<vmem>>, vector<1x32x256xf32>
      %86 = vector.shape_cast %85 : vector<1x32x256xf32> to vector<32x256xf32>
      %87 = vector.shape_cast %84 : vector<32x256xf32> to vector<1x32x256xf32>
      tpu.vector_store %arg8[%c2, %c0_40, %c0_41], %87 {strides = array<i32>} : memref<3x32x256xf32, #tpu.memory_space<vmem>>, vector<1x32x256xf32>,
    } else {
    }
    %c0 = arith.constant 0 : index
    %c0_4 = arith.constant 0 : index
    %c0_5 = arith.constant 0 : index
    %8 = vector.load %arg3[%c0, %c0_4, %c0_5] : memref<1x32x256xbf16, #tpu.memory_space<vmem>>, vector<1x32x256xbf16>
    %9 = vector.shape_cast %8 : vector<1x32x256xbf16> to vector<32x256xbf16>
    %10 = arith.extf %9 : vector<32x256xbf16> to vector<32x256xf32>
    %cst = arith.constant 1.000000e+01 : f32
    %11 = vector.broadcast %cst : f32 to vector<32x256xf32>
    %12 = arith.mulf %10, %11 : vector<32x256xf32>
    %cst_6 = arith.constant dense<0xFF800000> : vector<32xf32>
    %13 = vector.multi_reduction <maximumf>, %12, %cst_6 [1] : vector<32x256xf32> to vector<32xf32>
    %14 = vector.shape_cast %13 : vector<32xf32> to vector<32x1xf32>
    %15 = vector.broadcast %14 : vector<32x1xf32> to vector<32x256xf32>
    %16 = arith.subf %12, %15 : vector<32x256xf32>
    %17 = math.exp %16 : vector<32x256xf32>
    %cst_7 = arith.constant dense<0.000000e+00> : vector<32xf32>
    %18 = vector.multi_reduction <add>, %17, %cst_7 [1] : vector<32x256xf32> to vector<32xf32>
    %19 = vector.shape_cast %18 : vector<32xf32> to vector<32x1xf32>
    %20 = math.log %19 : vector<32x1xf32>
    %c2_i32 = arith.constant 2 : i32
    %21 = arith.cmpi sge, %arg2, %c2_i32 : i32
    %22 = arith.extui %21 : i1 to i32
    %c0_i32_8 = arith.constant 0 : i32
    %23 = arith.cmpi ne, %22, %c0_i32_8 : i32
    scf.if %23 {
      %c0_14 = arith.constant 0 : index
      %c0_15 = arith.constant 0 : index
      %35 = vector.load %arg10[%c0_14, %c0_15] : memref<1x256xf32, #tpu.memory_space<vmem>>, vector<1x256xf32>
      %c2 = arith.constant 2 : index
      %c0_16 = arith.constant 0 : index
      %c0_17 = arith.constant 0 : index
      %36 = vector.load %arg8[%c2, %c0_16, %c0_17] : memref<3x32x256xf32, #tpu.memory_space<vmem>>, vector<1x32x256xf32>
      %37 = vector.shape_cast %36 : vector<1x32x256xf32> to vector<32x256xf32>
      %38 = arith.mulf %37, %16 : vector<32x256xf32>
      %cst_18 = arith.constant dense<0.000000e+00> : vector<256xf32>
      %39 = vector.multi_reduction <add>, %38, %cst_18 [0] : vector<32x256xf32> to vector<256xf32>
      %40 = vector.shape_cast %39 : vector<256xf32> to vector<1x256xf32>
      %41 = arith.addf %35, %40 : vector<1x256xf32>
      %c0_19 = arith.constant 0 : index
      %c0_20 = arith.constant 0 : index
      %42 = vector.load %arg10[%c0_19, %c0_20] : memref<1x256xf32, #tpu.memory_space<vmem>>, vector<1x256xf32>
      tpu.vector_store %arg10[%c0_19, %c0_20], %41 {strides = array<i32>} : memref<1x256xf32, #tpu.memory_space<vmem>>, vector<1x256xf32>,
      %c0_21 = arith.constant 0 : index
      %c0_22 = arith.constant 0 : index
      %43 = vector.load %arg11[%c0_21, %c0_22] : memref<32x1xf32, #tpu.memory_space<vmem>>, vector<32x1xf32>
      %cst_23 = arith.constant 2.000000e+00 : f32
      %44 = vector.broadcast %cst_23 : f32 to vector<32x1xf32>
      %45 = arith.mulf %44, %20 : vector<32x1xf32>
      %46 = arith.addf %43, %45 : vector<32x1xf32>
      %c0_24 = arith.constant 0 : index
      %c0_25 = arith.constant 0 : index
      %47 = vector.load %arg11[%c0_24, %c0_25] : memref<32x1xf32, #tpu.memory_space<vmem>>, vector<32x1xf32>
      tpu.vector_store %arg11[%c0_24, %c0_25], %46 {strides = array<i32>} : memref<32x1xf32, #tpu.memory_space<vmem>>, vector<32x1xf32>,
    } else {
    }
    %c0_i32_9 = arith.constant 0 : i32
    %24 = arith.cmpi eq, %arg2, %c0_i32_9 : i32
    %25 = arith.extui %24 : i1 to i32
    %c0_i32_10 = arith.constant 0 : i32
    %26 = arith.cmpi ne, %25, %c0_i32_10 : i32
    scf.if %26 {
      %c0_14 = arith.constant 0 : index
      %c0_15 = arith.constant 0 : index
      %35 = vector.load %arg10[%c0_14, %c0_15] : memref<1x256xf32, #tpu.memory_space<vmem>>, vector<1x256xf32>
      %c1 = arith.constant 1 : index
      %c0_16 = arith.constant 0 : index
      %c0_17 = arith.constant 0 : index
      %36 = vector.load %arg8[%c1, %c0_16, %c0_17] : memref<3x32x256xf32, #tpu.memory_space<vmem>>, vector<1x32x256xf32>
      %37 = vector.shape_cast %36 : vector<1x32x256xf32> to vector<32x256xf32>
      %38 = arith.mulf %37, %16 : vector<32x256xf32>
      %cst_18 = arith.constant dense<0.000000e+00> : vector<256xf32>
      %39 = vector.multi_reduction <add>, %38, %cst_18 [0] : vector<32x256xf32> to vector<256xf32>
      %40 = vector.shape_cast %39 : vector<256xf32> to vector<1x256xf32>
      %41 = arith.addf %35, %40 : vector<1x256xf32>
      %c0_19 = arith.constant 0 : index
      %c0_20 = arith.constant 0 : index
      %42 = vector.load %arg10[%c0_19, %c0_20] : memref<1x256xf32, #tpu.memory_space<vmem>>, vector<1x256xf32>
      tpu.vector_store %arg10[%c0_19, %c0_20], %41 {strides = array<i32>} : memref<1x256xf32, #tpu.memory_space<vmem>>, vector<1x256xf32>,
      %c0_21 = arith.constant 0 : index
      %c0_22 = arith.constant 0 : index
      %43 = vector.load %arg11[%c0_21, %c0_22] : memref<32x1xf32, #tpu.memory_space<vmem>>, vector<32x1xf32>
      %44 = arith.addf %43, %20 : vector<32x1xf32>
      %c0_23 = arith.constant 0 : index
      %c0_24 = arith.constant 0 : index
      %45 = vector.load %arg11[%c0_23, %c0_24] : memref<32x1xf32, #tpu.memory_space<vmem>>, vector<32x1xf32>
      tpu.vector_store %arg11[%c0_23, %c0_24], %44 {strides = array<i32>} : memref<32x1xf32, #tpu.memory_space<vmem>>, vector<32x1xf32>,
    } else {
    }
    %c1_i32 = arith.constant 1 : i32
    %27 = arith.cmpi eq, %arg2, %c1_i32 : i32
    %28 = arith.extui %27 : i1 to i32
    %c0_i32_11 = arith.constant 0 : i32
    %29 = arith.cmpi ne, %28, %c0_i32_11 : i32
    scf.if %29 {
      %c0_14 = arith.constant 0 : index
      %c0_15 = arith.constant 0 : index
      %35 = vector.load %arg10[%c0_14, %c0_15] : memref<1x256xf32, #tpu.memory_space<vmem>>, vector<1x256xf32>
      %c0_16 = arith.constant 0 : index
      %c0_17 = arith.constant 0 : index
      %c0_18 = arith.constant 0 : index
      %36 = vector.load %arg8[%c0_16, %c0_17, %c0_18] : memref<3x32x256xf32, #tpu.memory_space<vmem>>, vector<1x32x256xf32>
      %37 = vector.shape_cast %36 : vector<1x32x256xf32> to vector<32x256xf32>
      %38 = arith.mulf %37, %16 : vector<32x256xf32>
      %cst_19 = arith.constant dense<0.000000e+00> : vector<256xf32>
      %39 = vector.multi_reduction <add>, %38, %cst_19 [0] : vector<32x256xf32> to vector<256xf32>
      %40 = vector.shape_cast %39 : vector<256xf32> to vector<1x256xf32>
      %41 = arith.addf %35, %40 : vector<1x256xf32>
      %c0_20 = arith.constant 0 : index
      %c0_21 = arith.constant 0 : index
      %42 = vector.load %arg10[%c0_20, %c0_21] : memref<1x256xf32, #tpu.memory_space<vmem>>, vector<1x256xf32>
      tpu.vector_store %arg10[%c0_20, %c0_21], %41 {strides = array<i32>} : memref<1x256xf32, #tpu.memory_space<vmem>>, vector<1x256xf32>,
      %c0_22 = arith.constant 0 : index
      %c0_23 = arith.constant 0 : index
      %43 = vector.load %arg11[%c0_22, %c0_23] : memref<32x1xf32, #tpu.memory_space<vmem>>, vector<32x1xf32>
      %44 = arith.addf %43, %20 : vector<32x1xf32>
      %c0_24 = arith.constant 0 : index
      %c0_25 = arith.constant 0 : index
      %45 = vector.load %arg11[%c0_24, %c0_25] : memref<32x1xf32, #tpu.memory_space<vmem>>, vector<32x1xf32>
      tpu.vector_store %arg11[%c0_24, %c0_25], %44 {strides = array<i32>} : memref<32x1xf32, #tpu.memory_space<vmem>>, vector<32x1xf32>,
    } else {
    }
    %c0_i32_12 = arith.constant 0 : i32
    %30 = arith.cmpi eq, %arg1, %c0_i32_12 : i32
    %c3_i32 = arith.constant 3 : i32
    %31 = arith.cmpi eq, %arg2, %c3_i32 : i32
    %32 = arith.andi %30, %31 : i1
    %33 = arith.extui %32 : i1 to i32
    %c0_i32_13 = arith.constant 0 : i32
    %34 = arith.cmpi ne, %33, %c0_i32_13 : i32
    scf.if %34 {
      %c0_14 = arith.constant 0 : index
      %c0_15 = arith.constant 0 : index
      %35 = vector.load %arg11[%c0_14, %c0_15] : memref<32x1xf32, #tpu.memory_space<vmem>>, vector<32x1xf32>
      %36 = vector.shape_cast %35 : vector<32x1xf32> to vector<1x32x1xf32>
      %cst_16 = arith.constant dense<0.000000e+00> : vector<1xf32>
      %37 = vector.multi_reduction <add>, %36, %cst_16 [1, 2] : vector<1x32x1xf32> to vector<1xf32>
      %38 = vector.shape_cast %37 : vector<1xf32> to vector<1x1x1xf32>
      %39 = vector.extract %38[0, 0, 0] : f32 from vector<1x1x1xf32>
      %c0_17 = arith.constant 0 : index
      %c0_18 = arith.constant 0 : index
      %40 = vector.load %arg10[%c0_17, %c0_18] : memref<1x256xf32, #tpu.memory_space<vmem>>, vector<1x256xf32>
      %41 = vector.shape_cast %40 : vector<1x256xf32> to vector<1x1x256xf32>
      %cst_19 = arith.constant dense<0.000000e+00> : vector<1xf32>
      %42 = vector.multi_reduction <add>, %41, %cst_19 [1, 2] : vector<1x1x256xf32> to vector<1xf32>
      %43 = vector.shape_cast %42 : vector<1xf32> to vector<1x1x1xf32>
      %44 = vector.extract %43[0, 0, 0] : f32 from vector<1x1x1xf32>
      %45 = arith.subf %39, %44 : f32
      %46 = vector.broadcast %45 : f32 to vector<1x1xf32>
      %c0_20 = arith.constant 0 : index
      %c0_21 = arith.constant 0 : index
      %c0_22 = arith.constant 0 : index
      %47 = vector.load %arg6[%c0_20, %c0_21, %c0_22] : memref<1x1x1xf32, #tpu.memory_space<vmem>>, vector<1x1x1xf32>
      %48 = vector.shape_cast %47 : vector<1x1x1xf32> to vector<1x1xf32>
      %49 = vector.shape_cast %46 : vector<1x1xf32> to vector<1x1x1xf32>
      tpu.vector_store %arg6[%c0_20, %c0_21, %c0_22], %49 {strides = array<i32>} : memref<1x1x1xf32, #tpu.memory_space<vmem>>, vector<1x1x1xf32>,
      %c0_23 = arith.constant 0 : index
      %c0_24 = arith.constant 0 : index
      %50 = vector.load %arg9[%c0_23, %c0_24] : memref<1x256xf32, #tpu.memory_space<vmem>>, vector<1x256xf32>
      %c0_25 = arith.constant 0 : index
      %c0_26 = arith.constant 0 : index
      %c0_27 = arith.constant 0 : index
      %51 = vector.load %arg7[%c0_25, %c0_26, %c0_27] : memref<1x1x256xf32, #tpu.memory_space<vmem>>, vector<1x1x256xf32>
      %52 = vector.shape_cast %51 : vector<1x1x256xf32> to vector<1x256xf32>
      %53 = vector.shape_cast %50 : vector<1x256xf32> to vector<1x1x256xf32>
      tpu.vector_store %arg7[%c0_25, %c0_26, %c0_27], %53 {strides = array<i32>} : memref<1x1x256xf32, #tpu.memory_space<vmem>>, vector<1x1x256xf32>,
    } else {
    }
    return
  }
  func.func @transform_0(%arg0: i32, %arg1: i32, %arg2: i32) -> (i32, i32, i32) {
    %c1_i32 = arith.constant 1 : i32
    %0 = arith.muli %arg0, %c1_i32 : i32
    %1 = arith.addi %0, %arg1 : i32
    %c0_i32 = arith.constant 0 : i32
    %c0_i32_0 = arith.constant 0 : i32
    return %arg2, %1, %c0_i32 : i32, i32, i32
  }
  func.func @transform_1(%arg0: i32, %arg1: i32, %arg2: i32) -> (i32, i32, i32) {
    %c1_i32 = arith.constant 1 : i32
    %0 = arith.muli %arg0, %c1_i32 : i32
    %1 = arith.addi %0, %arg1 : i32
    %c0_i32 = arith.constant 0 : i32
    %c0_i32_0 = arith.constant 0 : i32
    %c0_i32_1 = arith.constant 0 : i32
    return %c0_i32, %1, %c0_i32_0 : i32, i32, i32
  }
  func.func @transform_2(%arg0: i32, %arg1: i32, %arg2: i32) -> (i32, i32) {
    %c0_i32 = arith.constant 0 : i32
    %c0_i32_0 = arith.constant 0 : i32
    %c0_i32_1 = arith.constant 0 : i32
    return %c0_i32, %c0_i32_0 : i32, i32
  }
  func.func @transform_3(%arg0: i32, %arg1: i32, %arg2: i32) -> (i32, i32, i32) {
    %c0_i32 = arith.constant 0 : i32
    %c0_i32_0 = arith.constant 0 : i32
    %c0_i32_1 = arith.constant 0 : i32
    return %arg0, %c0_i32, %c0_i32_0 : i32, i32, i32
  }
  func.func @transform_4(%arg0: i32, %arg1: i32, %arg2: i32) -> (i32, i32, i32) {
    %c0_i32 = arith.constant 0 : i32
    %c0_i32_0 = arith.constant 0 : i32
    %c0_i32_1 = arith.constant 0 : i32
    return %arg0, %c0_i32, %c0_i32_0 : i32, i32, i32
  }
}

</mosaic_0001>

<llo_original>
// kernel: tpu_custom_call.1
$region0: #{tpu_custom_call.1}
  #allocation0 [shape = 'u32[]', space=smem, size = 0x4, offset = 0x4, fixed_abs, tag = 'smem constant byte address 0x4 - core index']
  #allocation1 [shape = 'u32[72,128]{1,0:T(1,128)}', space=vmem, size = 0x9000, scoped, tag = 'internal scratch']
  #allocation2 [shape = 'f32[3,32,256]{2,1,0:T(8,128)}', space=vmem, size = 0x18000, scoped, tag = 'scratch operand']
  #allocation3 [shape = 'f32[1,256]{1,0:T(1,128)}', space=vmem, size = 0x400, scoped, tag = 'scratch operand']
  #allocation4 [shape = 'f32[1,256]{1,0:T(1,128)}', space=vmem, size = 0x400, scoped, tag = 'scratch operand']
  #allocation5 [shape = 'f32[32,1]{1,0:T(8,128)}', space=vmem, size = 0x4000, scoped, tag = 'scratch operand']
  %s0 = inlined_call_operand.hbm [shape: bf16[4,32,256], index: 0, kind: input, shape index: {}]
  %s1 = inlined_call_operand.hbm [shape: bf16[2,32,256], index: 1, kind: input, shape index: {}]
  %s2 = inlined_call_operand.hbm [shape: f32[1,256], index: 2, kind: input, shape index: {}]
  %s3 = inlined_call_operand.hbm [shape: f32[1,1,1], index: 3, kind: output, shape index: {0}]
  %s4 = inlined_call_operand.hbm [shape: f32[1,1,256], index: 4, kind: output, shape index: {1}]
  %5 = xla_tuple %s3, %s4
  %s6 = sld [smem:[#allocation0]]
  $region89: #{tpu_custom_call.1} parent=0
    _
  %s8 = ssub.s32 1, %s6
  %s9 = scalar_select 0, %s8, %s6
  $region1: #{tpu_custom_call.1} parent=0
    #allocation6 [shape = 'u8[32768]{0}', space=vmem, size = 0x8000, scoped, tag = 'input window, operand 0']
    #allocation7 [shape = 's32[2]{0}', space=sflag, size = 0x8, scoped, tag = 'scoped memory for tpu_custom_call.1']
    #allocation8 [shape = 's32[2]{0}', space=sflag, size = 0x8, scoped, tag = 'scoped memory for tpu_custom_call.1']
    #allocation9 [shape = 'u8[32768]{0}', space=vmem, size = 0x8000, scoped, tag = 'input window, operand 1, single buffered']
    #allocation10 [shape = 's32[1]{0}', space=sflag, size = 0x4, scoped, tag = 'scoped memory for tpu_custom_call.1']
    #allocation11 [shape = 'u8[1024]{0}', space=vmem, size = 0x400, scoped, tag = 'input window, operand 2, single buffered']
    #allocation12 [shape = 'u8[512]{0}', space=vmem, size = 0x400, scoped, tag = 'output window, operand 0, single buffered']
    #allocation13 [shape = 'u8[1024]{0}', space=vmem, size = 0x400, scoped, tag = 'output window, operand 1, single buffered']
    #allocation14 [shape = 's32[1]{0}', space=sflag, size = 0x4, scoped, tag = 'scoped memory for tpu_custom_call.1']
    %10 = vsyncpa [#allocation7], 0
    %s11 = scalar_lea.sflag [#allocation7], 1
    %12 = vsyncpa %s11, 0
    %13 = vsyncpa [#allocation10], 0
    %14 = vsyncpa [#allocation8], 0
    %15 = vsyncpa [#allocation14], 0
    loop: start=0, step=1, limit=6
    $region2: #{tpu_custom_call.1} parent=1 // loop_pre_header
      _
    $region3: #{tpu_custom_call.1} parent=1 // loop_header
      %s17 = sphi 0, %s21
      %p18 = scmp.ge.s32.totalorder %s17, 6
      %s24 = sphi 0, %s43
      %s25 = sphi 0, %s39
      %s26 = sphi 0, %s35
      %s27 = sphi 0, %s24
      %s28 = sphi 0, %s25
      %s29 = sphi 0, %s26
      %s30 = sphi 0, %s27
      %s31 = sphi 0, %s28
      %s32 = sphi 0, %s29
      %s50 = sphi 0, %s52
      %s53 = sphi 0, %s50
      %s54 = sphi 0, %s53
      %s70 = sphi 0, %s54
      %s78 = sphi 0, %s80
      %s81 = sphi 0, %s78
      %s82 = sphi 0, %s81
      %s98 = sphi 0, %s82
      %s102 = sphi 0, %s102
      %s104 = sphi 0, %s102
      %s105 = sphi 0, %s104
      %s119 = sphi 0, %s105
      %s125 = sphi 0, %s127
      %s128 = sphi 0, %s125
      %s129 = sphi 0, %s128
      %s145 = sphi 0, %s129
      %s151 = sphi 0, %s153
      %s154 = sphi 0, %s151
      %s155 = sphi 0, %s154
      %s171 = sphi 0, %s155
    $region4: #{tpu_custom_call.1} parent=1 // loop_header_branch
      %20 = sbr.rel (%p18) target = $region8
    $region5: #{tpu_custom_call.1} parent=1 // loop_body
      %s22 = ssub.s32 %s17, 1
      %s23 = ssub.s32 %s17, 2
      %s33 = sadd.s32 1, %s26
      %p34 = scmp.ge.s32.totalorder %s33, 4
      %s35 = scalar_select %p34, 0, %s33
      %s36 = sadd.s32 1, %s25
      %s37 = scalar_select %p34, %s36, %s25
      %p38 = scmp.ge.s32.totalorder %s37, 1
      %s39 = scalar_select %p38, 0, %s37
      %s40 = sadd.s32 1, %s24
      %s41 = scalar_select %p38, %s40, %s24
      %p42 = scmp.ge.s32.totalorder %s41, 1
      %s43 = scalar_select %p42, 0, %s41
      %s44 = sadd.s32 %s24, %s25
      %s45 = sadd.s32 %s43, %s39
      %s46 = ssub.s32 %s26, %s35
      %s47 = ssub.s32 %s44, %s45
      %s48 = sor.u32 %s46, %s47
      %p49 = scmp.eq.s32.totalorder %s48, 0
      %s51 = sadd.s32 %s50, 1
      %s52 = scalar_select %p49, %s50, %s51
      %p55 = pneg %p49
      %p56 = scmp.eq.s32.totalorder %s17, 3
      %p57 = por %p55, %p56
      %p58 = scmp.ne.s32.totalorder %s50, %s53
      %p59 = scmp.eq.s32.totalorder %s17, 0
      %p60 = por %p58, %p59
      %p61 = scmp.ne.s32.totalorder %s50, %s53
      %p62 = scmp.eq.s32.totalorder %s22, 3
      %p63 = por %p61, %p62
      %p64 = scmp.ne.s32.totalorder %s53, %s54
      %p65 = scmp.eq.s32.totalorder %s22, 0
      %p66 = por %p64, %p65
      %p67 = scmp.ne.s32.totalorder %s53, %s54
      %p68 = scmp.eq.s32.totalorder %s23, 3
      %p69 = por %p67, %p68
      %p71 = scmp.ne.s32.totalorder %s54, %s70
      %p72 = scmp.eq.s32.totalorder %s23, 0
      %p73 = por %p71, %p72
      %s74 = sadd.s32 %s24, %s25
      %s75 = sadd.s32 %s43, %s39
      %s76 = ssub.s32 %s74, %s75
      %p77 = scmp.eq.s32.totalorder %s76, 0
      %s79 = sadd.s32 %s78, 1
      %s80 = scalar_select %p77, %s78, %s79
      %p83 = pneg %p77
      %p84 = scmp.eq.s32.totalorder %s17, 3
      %p85 = por %p83, %p84
      %p86 = scmp.ne.s32.totalorder %s78, %s81
      %p87 = scmp.eq.s32.totalorder %s17, 0
      %p88 = por %p86, %p87
      %p89 = scmp.ne.s32.totalorder %s78, %s81
      %p90 = scmp.eq.s32.totalorder %s22, 3
      %p91 = por %p89, %p90
      %p92 = scmp.ne.s32.totalorder %s81, %s82
      %p93 = scmp.eq.s32.totalorder %s22, 0
      %p94 = por %p92, %p93
      %p95 = scmp.ne.s32.totalorder %s81, %s82
      %p96 = scmp.eq.s32.totalorder %s23, 3
      %p97 = por %p95, %p96
      %p99 = scmp.ne.s32.totalorder %s82, %s98
      %p100 = scmp.eq.s32.totalorder %s23, 0
      %p101 = por %p99, %p100
      %s103 = sadd.s32 %s102, 1
      %p106 = scmp.eq.s32.totalorder %s17, 3
      %p107 = scmp.ne.s32.totalorder %s102, %s104
      %p108 = scmp.eq.s32.totalorder %s17, 0
      %p109 = por %p107, %p108
      %p110 = scmp.ne.s32.totalorder %s102, %s104
      %p111 = scmp.eq.s32.totalorder %s22, 3
      %p112 = por %p110, %p111
      %p113 = scmp.ne.s32.totalorder %s104, %s105
      %p114 = scmp.eq.s32.totalorder %s22, 0
      %p115 = por %p113, %p114
      %p116 = scmp.ne.s32.totalorder %s104, %s105
      %p117 = scmp.eq.s32.totalorder %s23, 3
      %p118 = por %p116, %p117
      %p120 = scmp.ne.s32.totalorder %s105, %s119
      %p121 = scmp.eq.s32.totalorder %s23, 0
      %p122 = por %p120, %p121
      %s123 = ssub.s32 %s24, %s43
      %p124 = scmp.eq.s32.totalorder %s123, 0
      %s126 = sadd.s32 %s125, 1
      %s127 = scalar_select %p124, %s125, %s126
      %p130 = pneg %p124
      %p131 = scmp.eq.s32.totalorder %s17, 3
      %p132 = por %p130, %p131
      %p133 = scmp.ne.s32.totalorder %s125, %s128
      %p134 = scmp.eq.s32.totalorder %s17, 0
      %p135 = por %p133, %p134
      %p136 = scmp.ne.s32.totalorder %s125, %s128
      %p137 = scmp.eq.s32.totalorder %s22, 3
      %p138 = por %p136, %p137
      %p139 = scmp.ne.s32.totalorder %s128, %s129
      %p140 = scmp.eq.s32.totalorder %s22, 0
      %p141 = por %p139, %p140
      %p142 = scmp.ne.s32.totalorder %s128, %s129
      %p143 = scmp.eq.s32.totalorder %s23, 3
      %p144 = por %p142, %p143
      %p146 = scmp.ne.s32.totalorder %s129, %s145
      %p147 = scmp.eq.s32.totalorder %s23, 0
      %p148 = por %p146, %p147
      %s149 = ssub.s32 %s24, %s43
      %p150 = scmp.eq.s32.totalorder %s149, 0
      %s152 = sadd.s32 %s151, 1
      %s153 = scalar_select %p150, %s151, %s152
      %p156 = pneg %p150
      %p157 = scmp.eq.s32.totalorder %s17, 3
      %p158 = por %p156, %p157
      %p159 = scmp.ne.s32.totalorder %s151, %s154
      %p160 = scmp.eq.s32.totalorder %s17, 0
      %p161 = por %p159, %p160
      %p162 = scmp.ne.s32.totalorder %s151, %s154
      %p163 = scmp.eq.s32.totalorder %s22, 3
      %p164 = por %p162, %p163
      %p165 = scmp.ne.s32.totalorder %s154, %s155
      %p166 = scmp.eq.s32.totalorder %s22, 0
      %p167 = por %p165, %p166
      %p168 = scmp.ne.s32.totalorder %s154, %s155
      %p169 = scmp.eq.s32.totalorder %s23, 3
      %p170 = por %p168, %p169
      %p172 = scmp.ne.s32.totalorder %s155, %s171
      %p173 = scmp.eq.s32.totalorder %s23, 0
      %p174 = por %p172, %p173
      %p175 = scmp.le.s32.totalorder 1, %s17
      %p176 = scmp.lt.s32.totalorder %s17, 5
      %p177 = pnand %p175, %p176
      %p178 = pneg %p177
      // Predicated region
      $region9: #{tpu_custom_call.1} parent=5 // pred_check
        _
      $region10: #{tpu_custom_call.1} parent=5 // pred_check_branch
        %180 = sbr.rel (%p177) target = $region12
      $region11: #{tpu_custom_call.1} parent=5 // pred_region
        %s181 = ssub.s32 %s17, 1
        // Predicated region
        $region13: #{tpu_custom_call.1} parent=11 // pred_check
          %p182 = pneg %p94
        $region14: #{tpu_custom_call.1} parent=11 // pred_check_branch
          %184 = sbr.rel (%p182) target = $region16
        $region15: #{tpu_custom_call.1} parent=11 // pred_region
          %s185 = sadd.s32 %s27, %s28
          %s186 = smul.u32 4, %s185
          %188 = vsyncadd [#allocation10], 0
          %s189 = smul.addr %s186, 2
          %s190 = smul.addr %s189, 4
          %s191 = scalar_lea.hbm %s1, %s190
          %s192 = sshll.u32 %s191, 4
          %s193 = int_to_ptr.hbm [resolvable:$true] %s192
          %s194 = sshll.u32 [#allocation9], 4
          %s195 = int_to_ptr.vmem [resolvable:$true] %s194
          %200 = dma.hbm_to_vmem [thread:$0]  %s193, 1024, %s195, [#allocation10], 128, 128, 8
        $region16: #{tpu_custom_call.1} parent=11 // pred_fallthru
          _
        // Predicated region
        $region17: #{tpu_custom_call.1} parent=11 // pred_check
          %p201 = pneg %p115
        $region18: #{tpu_custom_call.1} parent=11 // pred_check_branch
          %203 = sbr.rel (%p201) target = $region20
        $region19: #{tpu_custom_call.1} parent=11 // pred_region
          %205 = vsyncadd [#allocation10], 0
          %s207 = sshll.u32 %s2, 4
          %s208 = int_to_ptr.hbm [resolvable:$true] %s207
          %s209 = sshll.u32 [#allocation11], 4
          %s210 = int_to_ptr.vmem [resolvable:$true] %s209
          %212 = dma.hbm_to_vmem [thread:$0]  %s208, 32, %s210, [#allocation10]
        $region20: #{tpu_custom_call.1} parent=11 // pred_fallthru
          _
      $region12: #{tpu_custom_call.1} parent=5 // pred_fallthru
        _
      %p213 = scmp.lt.s32.totalorder %s17, 4
      // Predicated region
      $region21: #{tpu_custom_call.1} parent=5 // pred_check
        %p214 = pneg %p213
      $region22: #{tpu_custom_call.1} parent=5 // pred_check_branch
        %216 = sbr.rel (%p214) target = $region24
      $region23: #{tpu_custom_call.1} parent=5 // pred_region
        // Predicated region
        $region25: #{tpu_custom_call.1} parent=23 // pred_check
          %p217 = pneg %p60
        $region26: #{tpu_custom_call.1} parent=23 // pred_check_branch
          %219 = sbr.rel (%p217) target = $region28
        $region27: #{tpu_custom_call.1} parent=23 // pred_region
          %s220 = sand.u32 %s50, 1
          %s221 = scalar_lea.sflag [#allocation7], %s220
          %s222 = sand.u32 %s50, 1
          %s223 = smul.addr %s222, 32
          %s224 = scalar_lea.vmem [#allocation6], %s223
          %s225 = sadd.s32 %s24, %s25
          %s226 = smul.u32 4, %s225
          %228 = vsyncadd %s221, 0
          %s229 = smul.addr %s226, 2
          %s230 = smul.addr %s26, 8
          %s231 = sadd.s32 %s229, %s230
          %s232 = smul.addr %s231, 4
          %s233 = scalar_lea.hbm %s0, %s232
          %s234 = sshll.u32 %s233, 4
          %s235 = int_to_ptr.hbm [resolvable:$true] %s234
          %s236 = sshll.u32 %s224, 4
          %s237 = int_to_ptr.vmem [resolvable:$true] %s236
          %242 = dma.hbm_to_vmem [thread:$0]  %s235, 512, %s237, %s221, 128, 128, 8
        $region28: #{tpu_custom_call.1} parent=23 // pred_fallthru
          _
      $region24: #{tpu_custom_call.1} parent=5 // pred_fallthru
        _
      %p243 = scmp.le.s32.totalorder 1, %s17
      %p244 = scmp.lt.s32.totalorder %s17, 5
      %p245 = pnand %p243, %p244
      %p246 = pneg %p245
      // Predicated region
      $region29: #{tpu_custom_call.1} parent=5 // pred_check
        _
      $region30: #{tpu_custom_call.1} parent=5 // pred_check_branch
        %248 = sbr.rel (%p245) target = $region32
      $region31: #{tpu_custom_call.1} parent=5 // pred_region
        %s249 = ssub.s32 %s17, 1
        %s250 = sand.u32 %s53, 1
        %s251 = scalar_lea.sflag [#allocation7], %s250
        %s252 = sand.u32 %s53, 1
        %s253 = smul.addr %s252, 32
        %s254 = scalar_lea.vmem [#allocation6], %s253
        // Predicated region
        $region33: #{tpu_custom_call.1} parent=31 // pred_check
          %p255 = pneg %p66
        $region34: #{tpu_custom_call.1} parent=31 // pred_check_branch
          %257 = sbr.rel (%p255) target = $region36
        $region35: #{tpu_custom_call.1} parent=31 // pred_region
          %259 = dma.done %s251, 512
        $region36: #{tpu_custom_call.1} parent=31 // pred_fallthru
          _
        // Predicated region
        $region37: #{tpu_custom_call.1} parent=31 // pred_check
          %p260 = pneg %p94
        $region38: #{tpu_custom_call.1} parent=31 // pred_check_branch
          %262 = sbr.rel (%p260) target = $region40
        $region39: #{tpu_custom_call.1} parent=31 // pred_region
          %264 = dma.done [#allocation10], 1024
        $region40: #{tpu_custom_call.1} parent=31 // pred_fallthru
          _
        // Predicated region
        $region41: #{tpu_custom_call.1} parent=31 // pred_check
          %p265 = pneg %p115
        $region42: #{tpu_custom_call.1} parent=31 // pred_check_branch
          %267 = sbr.rel (%p265) target = $region44
        $region43: #{tpu_custom_call.1} parent=31 // pred_region
          %269 = dma.done [#allocation10], 32
        $region44: #{tpu_custom_call.1} parent=31 // pred_fallthru
          _
        %s270 = sand.u32 %s53, 1
        %s271 = scalar_lea.sflag [#allocation7], %s270
        %s272 = sand.u32 %s53, 1
        %s273 = smul.addr %s272, 32
        %s274 = scalar_lea.vmem [#allocation6], %s273
        %p275 = pneg %p66
        %p276 = pneg %p63
        %p277 = pneg %p94
        %p278 = pneg %p91
        %p279 = pneg %p115
        %p280 = pneg %p112
        %p281 = pneg %p141
        %p282 = pneg %p138
        %p283 = pneg %p167
        %p284 = pneg %p164
        %s285 = sadd.s32 %s27, %s28
        %s286 = smul.u32 4, %s285
        %s287 = sadd.s32 %s27, %s28
        %s288 = smul.u32 4, %s287
        %p289 = scmp.eq.s32.totalorder %s28, 0
        %p290 = scmp.eq.s32.totalorder %s29, 0
        %p291 = pnand %p289, %p290
        %p292 = pneg %p291
        // Predicated region
        $region45: #{tpu_custom_call.1} parent=31 // pred_check
          _
        $region46: #{tpu_custom_call.1} parent=31 // pred_check_branch
          %294 = sbr.rel (%p291) target = $region48
        $region47: #{tpu_custom_call.1} parent=31 // pred_region
          %v295 = vlaneseq
          %vm296 = vcmp.ge.s32.totalorder %v295, 0
          %vm297 = vcmp.lt.s32.totalorder %v295, 256
          %vm298 = vmand %vm296, %vm297
          %299 = vst.msk [vmem:[#allocation3] sm:$0x3] %vm298, 0.0
          %300 = vst.msk [vmem:[#allocation4] sm:$0x3] %vm298, 0.0
          %vm301 = vcmask 7168
          %302 = vst.msk [vmem:[#allocation5] sm:$0xff] %vm301, 0.0
          %303 = vst.msk [vmem:[#allocation5 + $0x8] sm:$0xff] %vm301, 0.0
          %304 = vst.msk [vmem:[#allocation5 + $0x10] sm:$0xff] %vm301, 0.0
          %305 = vst.msk [vmem:[#allocation5 + $0x18] sm:$0xff] %vm301, 0.0
        $region48: #{tpu_custom_call.1} parent=31 // pred_fallthru
          _
        // Predicated region
        $region49: #{tpu_custom_call.1} parent=31 // pred_check
          %p306 = pneg %p290
        $region50: #{tpu_custom_call.1} parent=31 // pred_check_branch
          %308 = sbr.rel (%p306) target = $region52
        $region51: #{tpu_custom_call.1} parent=31 // pred_region
          %v309 = vld [vmem:[#allocation11] sm:$0x3]
          %v310 = vld [vmem:[#allocation9] sm:$0xff]
          %v311 = vld [vmem:[#allocation9 + $0x8] sm:$0xff]
          %v312 = vld [vmem:[#allocation9 + $0x10] sm:$0xff]
          %v313 = vld [vmem:[#allocation9 + $0x18] sm:$0xff]
          %v314 = vunpack.c.l.bf16 %v310
          %v315 = vunpack.c.h.bf16 %v310
          %v316 = vunpack.c.l.bf16 %v311
          %v317 = vunpack.c.h.bf16 %v311
          %v318 = vunpack.c.l.bf16 %v312
          %v319 = vunpack.c.h.bf16 %v312
          %v320 = vunpack.c.l.bf16 %v313
          %v321 = vunpack.c.h.bf16 %v313
          %s322 = scalar_lea.vmem [#allocation9], 32
          %v323 = vld [vmem:[%s322] sm:$0xff]
          %v324 = vld [vmem:[%s322 + $0x8] sm:$0xff]
          %v325 = vld [vmem:[%s322 + $0x10] sm:$0xff]
          %v326 = vld [vmem:[%s322 + $0x18] sm:$0xff]
          %v327 = vunpack.c.l.bf16 %v323
          %v328 = vunpack.c.h.bf16 %v323
          %v329 = vunpack.c.l.bf16 %v324
          %v330 = vunpack.c.h.bf16 %v324
          %v331 = vunpack.c.l.bf16 %v325
          %v332 = vunpack.c.h.bf16 %v325
          %v333 = vunpack.c.l.bf16 %v326
          %v334 = vunpack.c.h.bf16 %v326
          %v335 = vld [vmem:[#allocation3] sm:$0x3]
          %v336 = vadd.f32 %v314, %v327
          %v337 = vadd.f32 %v315, %v328
          %v338 = vadd.f32 %v316, %v329
          %v339 = vadd.f32 %v317, %v330
          %v340 = vadd.f32 %v318, %v331
          %v341 = vadd.f32 %v319, %v332
          %v342 = vadd.f32 %v320, %v333
          %v343 = vadd.f32 %v321, %v334
          %v344 = vadd.f32 %v336, %v338
          %v345 = vadd.f32 %v344, %v340
          %v346 = vadd.f32 %v345, %v342
          %v347 = vrot.slane %v346, 4
          %v348 = vadd.f32 %v346, %v347
          %v349 = vrot.slane %v348, 2
          %v350 = vadd.f32 %v348, %v349
          %v351 = vrot.slane %v350, 1
          %v352 = vadd.f32 %v350, %v351
          %v353 = vadd.f32 %v337, %v339
          %v354 = vadd.f32 %v353, %v341
          %v355 = vadd.f32 %v354, %v343
          %v356 = vrot.slane %v355, 4
          %v357 = vadd.f32 %v355, %v356
          %v358 = vrot.slane %v357, 2
          %v359 = vadd.f32 %v357, %v358
          %v360 = vrot.slane %v359, 1
          %v361 = vadd.f32 %v359, %v360
          %v364 = vrot.slane %v361, 7
          %vm365 = vcmask 1040384
          %v366 = vsel %vm365, %v352, %v364
          %v368 = vadd.f32 %v335, %v366
          %v369 = vlaneseq
          %vm370 = vcmp.ge.s32.totalorder %v369, 0
          %vm371 = vcmp.lt.s32.totalorder %v369, 256
          %vm372 = vmand %vm370, %vm371
          %373 = vst.msk [vmem:[#allocation3] sm:$0x3] %vm372, %v368
          %v375 = vperm.slane %v309, 0
          %v376 = vperm.slane %v309, 1
          %v379 = vsub.f32 %v314, %v375
          %v380 = vsub.f32 %v315, %v376
          %v381 = vsub.f32 %v316, %v375
          %v382 = vsub.f32 %v317, %v376
          %v383 = vsub.f32 %v318, %v375
          %v384 = vsub.f32 %v319, %v376
          %v385 = vsub.f32 %v320, %v375
          %v386 = vsub.f32 %v321, %v376
          %v387 = vmul.f32 %v379, 18.181818
          %v388 = vmul.f32 %v380, 18.181818
          %v389 = vmul.f32 %v381, 18.181818
          %v390 = vmul.f32 %v382, 18.181818
          %v391 = vmul.f32 %v383, 18.181818
          %v392 = vmul.f32 %v384, 18.181818
          %v393 = vmul.f32 %v385, 18.181818
          %v394 = vmul.f32 %v386, 18.181818
          %v395 = vmax.f32 %v387, %v388
          %396 = vmax.xlane.f32.xlu0 %v395
          %v397 = vpop.xlane.xlu0 %396
          %v398 = vmax.f32 %v389, %v390
          %399 = vmax.xlane.f32.xlu0 %v398
          %v400 = vpop.xlane.xlu0 %399
          %v401 = vmax.f32 %v391, %v392
          %402 = vmax.xlane.f32.xlu0 %v401
          %v403 = vpop.xlane.xlu0 %402
          %v404 = vmax.f32 %v393, %v394
          %405 = vmax.xlane.f32.xlu0 %v404
          %v406 = vpop.xlane.xlu0 %405
          %v407 = vsub.f32 %v387, %v397
          %v408 = vsub.f32 %v388, %v397
          %v409 = vsub.f32 %v389, %v400
          %v410 = vsub.f32 %v390, %v400
          %v411 = vsub.f32 %v391, %v403
          %v412 = vsub.f32 %v392, %v403
          %v413 = vsub.f32 %v393, %v406
          %v414 = vsub.f32 %v394, %v406
          %v415 = vmul.f32 %v407, 1.442695
          %v416 = vpow.pop %v415
          %v417 = vmul.f32 %v408, 1.442695
          %v418 = vpow.pop %v417
          %v419 = vmul.f32 %v409, 1.442695
          %v420 = vpow.pop %v419
          %v421 = vmul.f32 %v410, 1.442695
          %v422 = vpow.pop %v421
          %v423 = vmul.f32 %v411, 1.442695
          %v424 = vpow.pop %v423
          %v425 = vmul.f32 %v412, 1.442695
          %v426 = vpow.pop %v425
          %v427 = vmul.f32 %v413, 1.442695
          %v428 = vpow.pop %v427
          %v429 = vmul.f32 %v414, 1.442695
          %v430 = vpow.pop %v429
          %v431 = vadd.f32 %v416, %v418
          %432 = vadd.xlane.f32.xlu0 %v431
          %v433 = vpop.xlane.xlu0 %432
          %v434 = vadd.f32 %v420, %v422
          %435 = vadd.xlane.f32.xlu0 %v434
          %v436 = vpop.xlane.xlu0 %435
          %v437 = vadd.f32 %v424, %v426
          %438 = vadd.xlane.f32.xlu0 %v437
          %v439 = vpop.xlane.xlu0 %438
          %v440 = vadd.f32 %v428, %v430
          %441 = vadd.xlane.f32.xlu0 %v440
          %v442 = vpop.xlane.xlu0 %441
          %v443 = vrcp.pop %v433
          %v444 = vmul.f32 %v433, %v443
          %v445 = vsub.f32 1.0, %v444
          %v446 = vmul.f32 %v443, %v445
          %v447 = vadd.f32 %v443, %v446
          %vm448 = vweird.f32 %v433
          %vm449 = vweird.f32 %v443
          %vm450 = vmor %vm448, %vm449
          %v451 = vsel %vm450, %v443, %v447
          %v452 = vand.u32 2147483647, %v433
          %vm453 = vcmp.eq.f32.partialorder %v452, 8.507059e+37
          %v454 = vand.u32 %v433, 2147483648
          %v455 = vor.u32 1.1754944e-38, %v454
          %v456 = vsel %vm453, %v455, %v451
          %v457 = vmul.f32 1.0, %v456
          %v458 = vrcp.pop %v436
          %v459 = vmul.f32 %v436, %v458
          %v460 = vsub.f32 1.0, %v459
          %v461 = vmul.f32 %v458, %v460
          %v462 = vadd.f32 %v458, %v461
          %vm463 = vweird.f32 %v436
          %vm464 = vweird.f32 %v458
          %vm465 = vmor %vm463, %vm464
          %v466 = vsel %vm465, %v458, %v462
          %v467 = vand.u32 2147483647, %v436
          %vm468 = vcmp.eq.f32.partialorder %v467, 8.507059e+37
          %v469 = vand.u32 %v436, 2147483648
          %v470 = vor.u32 1.1754944e-38, %v469
          %v471 = vsel %vm468, %v470, %v466
          %v472 = vmul.f32 1.0, %v471
          %v473 = vrcp.pop %v439
          %v474 = vmul.f32 %v439, %v473
          %v475 = vsub.f32 1.0, %v474
          %v476 = vmul.f32 %v473, %v475
          %v477 = vadd.f32 %v473, %v476
          %vm478 = vweird.f32 %v439
          %vm479 = vweird.f32 %v473
          %vm480 = vmor %vm478, %vm479
          %v481 = vsel %vm480, %v473, %v477
          %v482 = vand.u32 2147483647, %v439
          %vm483 = vcmp.eq.f32.partialorder %v482, 8.507059e+37
          %v484 = vand.u32 %v439, 2147483648
          %v485 = vor.u32 1.1754944e-38, %v484
          %v486 = vsel %vm483, %v485, %v481
          %v487 = vmul.f32 1.0, %v486
          %v488 = vrcp.pop %v442
          %v489 = vmul.f32 %v442, %v488
          %v490 = vsub.f32 1.0, %v489
          %v491 = vmul.f32 %v488, %v490
          %v492 = vadd.f32 %v488, %v491
          %vm493 = vweird.f32 %v442
          %vm494 = vweird.f32 %v488
          %vm495 = vmor %vm493, %vm494
          %v496 = vsel %vm495, %v488, %v492
          %v497 = vand.u32 2147483647, %v442
          %vm498 = vcmp.eq.f32.partialorder %v497, 8.507059e+37
          %v499 = vand.u32 %v442, 2147483648
          %v500 = vor.u32 1.1754944e-38, %v499
          %v501 = vsel %vm498, %v500, %v496
          %v502 = vmul.f32 1.0, %v501
          %v503 = vmul.f32 %v416, %v457
          %v504 = vmul.f32 %v418, %v457
          %v505 = vmul.f32 %v420, %v472
          %v506 = vmul.f32 %v422, %v472
          %v507 = vmul.f32 %v424, %v487
          %v508 = vmul.f32 %v426, %v487
          %v509 = vmul.f32 %v428, %v502
          %v510 = vmul.f32 %v430, %v502
          %v511 = vsub.f32 %v327, %v375
          %v512 = vsub.f32 %v328, %v376
          %v513 = vsub.f32 %v329, %v375
          %v514 = vsub.f32 %v330, %v376
          %v515 = vsub.f32 %v331, %v375
          %v516 = vsub.f32 %v332, %v376
          %v517 = vsub.f32 %v333, %v375
          %v518 = vsub.f32 %v334, %v376
          %v519 = vmul.f32 %v511, 18.181818
          %v520 = vmul.f32 %v512, 18.181818
          %v521 = vmul.f32 %v513, 18.181818
          %v522 = vmul.f32 %v514, 18.181818
          %v523 = vmul.f32 %v515, 18.181818
          %v524 = vmul.f32 %v516, 18.181818
          %v525 = vmul.f32 %v517, 18.181818
          %v526 = vmul.f32 %v518, 18.181818
          %v527 = vmax.f32 %v519, %v520
          %528 = vmax.xlane.f32.xlu0 %v527
          %v529 = vpop.xlane.xlu0 %528
          %v530 = vmax.f32 %v521, %v522
          %531 = vmax.xlane.f32.xlu0 %v530
          %v532 = vpop.xlane.xlu0 %531
          %v533 = vmax.f32 %v523, %v524
          %534 = vmax.xlane.f32.xlu0 %v533
          %v535 = vpop.xlane.xlu0 %534
          %v536 = vmax.f32 %v525, %v526
          %537 = vmax.xlane.f32.xlu0 %v536
          %v538 = vpop.xlane.xlu0 %537
          %v539 = vsub.f32 %v519, %v529
          %v540 = vsub.f32 %v520, %v529
          %v541 = vsub.f32 %v521, %v532
          %v542 = vsub.f32 %v522, %v532
          %v543 = vsub.f32 %v523, %v535
          %v544 = vsub.f32 %v524, %v535
          %v545 = vsub.f32 %v525, %v538
          %v546 = vsub.f32 %v526, %v538
          %v547 = vmul.f32 %v539, 1.442695
          %v548 = vpow.pop %v547
          %v549 = vmul.f32 %v540, 1.442695
          %v550 = vpow.pop %v549
          %v551 = vmul.f32 %v541, 1.442695
          %v552 = vpow.pop %v551
          %v553 = vmul.f32 %v542, 1.442695
          %v554 = vpow.pop %v553
          %v555 = vmul.f32 %v543, 1.442695
          %v556 = vpow.pop %v555
          %v557 = vmul.f32 %v544, 1.442695
          %v558 = vpow.pop %v557
          %v559 = vmul.f32 %v545, 1.442695
          %v560 = vpow.pop %v559
          %v561 = vmul.f32 %v546, 1.442695
          %v562 = vpow.pop %v561
          %v563 = vadd.f32 %v548, %v550
          %564 = vadd.xlane.f32.xlu0 %v563
          %v565 = vpop.xlane.xlu0 %564
          %v566 = vadd.f32 %v552, %v554
          %567 = vadd.xlane.f32.xlu0 %v566
          %v568 = vpop.xlane.xlu0 %567
          %v569 = vadd.f32 %v556, %v558
          %570 = vadd.xlane.f32.xlu0 %v569
          %v571 = vpop.xlane.xlu0 %570
          %v572 = vadd.f32 %v560, %v562
          %573 = vadd.xlane.f32.xlu0 %v572
          %v574 = vpop.xlane.xlu0 %573
          %v575 = vrcp.pop %v565
          %v576 = vmul.f32 %v565, %v575
          %v577 = vsub.f32 1.0, %v576
          %v578 = vmul.f32 %v575, %v577
          %v579 = vadd.f32 %v575, %v578
          %vm580 = vweird.f32 %v565
          %vm581 = vweird.f32 %v575
          %vm582 = vmor %vm580, %vm581
          %v583 = vsel %vm582, %v575, %v579
          %v584 = vand.u32 2147483647, %v565
          %vm585 = vcmp.eq.f32.partialorder %v584, 8.507059e+37
          %v586 = vand.u32 %v565, 2147483648
          %v587 = vor.u32 1.1754944e-38, %v586
          %v588 = vsel %vm585, %v587, %v583
          %v589 = vmul.f32 1.0, %v588
          %v590 = vrcp.pop %v568
          %v591 = vmul.f32 %v568, %v590
          %v592 = vsub.f32 1.0, %v591
          %v593 = vmul.f32 %v590, %v592
          %v594 = vadd.f32 %v590, %v593
          %vm595 = vweird.f32 %v568
          %vm596 = vweird.f32 %v590
          %vm597 = vmor %vm595, %vm596
          %v598 = vsel %vm597, %v590, %v594
          %v599 = vand.u32 2147483647, %v568
          %vm600 = vcmp.eq.f32.partialorder %v599, 8.507059e+37
          %v601 = vand.u32 %v568, 2147483648
          %v602 = vor.u32 1.1754944e-38, %v601
          %v603 = vsel %vm600, %v602, %v598
          %v604 = vmul.f32 1.0, %v603
          %v605 = vrcp.pop %v571
          %v606 = vmul.f32 %v571, %v605
          %v607 = vsub.f32 1.0, %v606
          %v608 = vmul.f32 %v605, %v607
          %v609 = vadd.f32 %v605, %v608
          %vm610 = vweird.f32 %v571
          %vm611 = vweird.f32 %v605
          %vm612 = vmor %vm610, %vm611
          %v613 = vsel %vm612, %v605, %v609
          %v614 = vand.u32 2147483647, %v571
          %vm615 = vcmp.eq.f32.partialorder %v614, 8.507059e+37
          %v616 = vand.u32 %v571, 2147483648
          %v617 = vor.u32 1.1754944e-38, %v616
          %v618 = vsel %vm615, %v617, %v613
          %v619 = vmul.f32 1.0, %v618
          %v620 = vrcp.pop %v574
          %v621 = vmul.f32 %v574, %v620
          %v622 = vsub.f32 1.0, %v621
          %v623 = vmul.f32 %v620, %v622
          %v624 = vadd.f32 %v620, %v623
          %vm625 = vweird.f32 %v574
          %vm626 = vweird.f32 %v620
          %vm627 = vmor %vm625, %vm626
          %v628 = vsel %vm627, %v620, %v624
          %v629 = vand.u32 2147483647, %v574
          %vm630 = vcmp.eq.f32.partialorder %v629, 8.507059e+37
          %v631 = vand.u32 %v574, 2147483648
          %v632 = vor.u32 1.1754944e-38, %v631
          %v633 = vsel %vm630, %v632, %v628
          %v634 = vmul.f32 1.0, %v633
          %v635 = vmul.f32 %v548, %v589
          %v636 = vmul.f32 %v550, %v589
          %v637 = vmul.f32 %v552, %v604
          %v638 = vmul.f32 %v554, %v604
          %v639 = vmul.f32 %v556, %v619
          %v640 = vmul.f32 %v558, %v619
          %v641 = vmul.f32 %v560, %v634
          %v642 = vmul.f32 %v562, %v634
          %643 = vst [vmem:[#allocation2] sm:$0xff] %v503
          %644 = vst [vmem:[#allocation2 + $0x8] sm:$0xff] %v504
          %645 = vst [vmem:[#allocation2 + $0x10] sm:$0xff] %v505
          %646 = vst [vmem:[#allocation2 + $0x18] sm:$0xff] %v506
          %647 = vst [vmem:[#allocation2 + $0x20] sm:$0xff] %v507
          %648 = vst [vmem:[#allocation2 + $0x28] sm:$0xff] %v508
          %649 = vst [vmem:[#allocation2 + $0x30] sm:$0xff] %v509
          %650 = vst [vmem:[#allocation2 + $0x38] sm:$0xff] %v510
          %s651 = scalar_lea.vmem [#allocation2], 64
          %652 = vst [vmem:[%s651] sm:$0xff] %v635
          %653 = vst [vmem:[%s651 + $0x8] sm:$0xff] %v636
          %654 = vst [vmem:[%s651 + $0x10] sm:$0xff] %v637
          %655 = vst [vmem:[%s651 + $0x18] sm:$0xff] %v638
          %656 = vst [vmem:[%s651 + $0x20] sm:$0xff] %v639
          %657 = vst [vmem:[%s651 + $0x28] sm:$0xff] %v640
          %658 = vst [vmem:[%s651 + $0x30] sm:$0xff] %v641
          %659 = vst [vmem:[%s651 + $0x38] sm:$0xff] %v642
          %v660 = vadd.f32 %v503, %v635
          %v661 = vadd.f32 %v504, %v636
          %v662 = vadd.f32 %v505, %v637
          %v663 = vadd.f32 %v506, %v638
          %v664 = vadd.f32 %v507, %v639
          %v665 = vadd.f32 %v508, %v640
          %v666 = vadd.f32 %v509, %v641
          %v667 = vadd.f32 %v510, %v642
          %s668 = scalar_lea.vmem [#allocation2], 128
          %669 = vst [vmem:[%s668] sm:$0xff] %v660
          %670 = vst [vmem:[%s668 + $0x8] sm:$0xff] %v661
          %671 = vst [vmem:[%s668 + $0x10] sm:$0xff] %v662
          %672 = vst [vmem:[%s668 + $0x18] sm:$0xff] %v663
          %673 = vst [vmem:[%s668 + $0x20] sm:$0xff] %v664
          %674 = vst [vmem:[%s668 + $0x28] sm:$0xff] %v665
          %675 = vst [vmem:[%s668 + $0x30] sm:$0xff] %v666
          %676 = vst [vmem:[%s668 + $0x38] sm:$0xff] %v667
        $region52: #{tpu_custom_call.1} parent=31 // pred_fallthru
          _
        %v677 = vld [vmem:[%s254] sm:$0xff]
        %v678 = vld [vmem:[%s254 + $0x8] sm:$0xff]
        %v679 = vld [vmem:[%s254 + $0x10] sm:$0xff]
        %v680 = vld [vmem:[%s254 + $0x18] sm:$0xff]
        %v681 = vunpack.c.l.bf16 %v677
        %v682 = vunpack.c.h.bf16 %v677
        %v683 = vunpack.c.l.bf16 %v678
        %v684 = vunpack.c.h.bf16 %v678
        %v685 = vunpack.c.l.bf16 %v679
        %v686 = vunpack.c.h.bf16 %v679
        %v687 = vunpack.c.l.bf16 %v680
        %v688 = vunpack.c.h.bf16 %v680
        %v689 = vmul.f32 %v681, 10.0
        %v690 = vmul.f32 %v682, 10.0
        %v691 = vmul.f32 %v683, 10.0
        %v692 = vmul.f32 %v684, 10.0
        %v693 = vmul.f32 %v685, 10.0
        %v694 = vmul.f32 %v686, 10.0
        %v695 = vmul.f32 %v687, 10.0
        %v696 = vmul.f32 %v688, 10.0
        %v697 = vmax.f32 %v689, %v690
        %698 = vmax.xlane.f32.xlu0 %v697
        %v699 = vpop.xlane.xlu0 %698
        %v700 = vmax.f32 %v691, %v692
        %701 = vmax.xlane.f32.xlu0 %v700
        %v702 = vpop.xlane.xlu0 %701
        %v703 = vmax.f32 %v693, %v694
        %704 = vmax.xlane.f32.xlu0 %v703
        %v705 = vpop.xlane.xlu0 %704
        %v706 = vmax.f32 %v695, %v696
        %707 = vmax.xlane.f32.xlu0 %v706
        %v708 = vpop.xlane.xlu0 %707
        %v709 = vsub.f32 %v689, %v699
        %v710 = vsub.f32 %v690, %v699
        %v711 = vsub.f32 %v691, %v702
        %v712 = vsub.f32 %v692, %v702
        %v713 = vsub.f32 %v693, %v705
        %v714 = vsub.f32 %v694, %v705
        %v715 = vsub.f32 %v695, %v708
        %v716 = vsub.f32 %v696, %v708
        %v717 = vmul.f32 %v709, 1.442695
        %v718 = vpow.pop %v717
        %v719 = vmul.f32 %v710, 1.442695
        %v720 = vpow.pop %v719
        %v721 = vmul.f32 %v711, 1.442695
        %v722 = vpow.pop %v721
        %v723 = vmul.f32 %v712, 1.442695
        %v724 = vpow.pop %v723
        %v725 = vmul.f32 %v713, 1.442695
        %v726 = vpow.pop %v725
        %v727 = vmul.f32 %v714, 1.442695
        %v728 = vpow.pop %v727
        %v729 = vmul.f32 %v715, 1.442695
        %v730 = vpow.pop %v729
        %v731 = vmul.f32 %v716, 1.442695
        %v732 = vpow.pop %v731
        %v733 = vadd.f32 %v718, %v720
        %734 = vadd.xlane.f32.xlu0 %v733
        %v735 = vpop.xlane.xlu0 %734
        %v736 = vadd.f32 %v722, %v724
        %737 = vadd.xlane.f32.xlu0 %v736
        %v738 = vpop.xlane.xlu0 %737
        %v739 = vadd.f32 %v726, %v728
        %740 = vadd.xlane.f32.xlu0 %v739
        %v741 = vpop.xlane.xlu0 %740
        %v742 = vadd.f32 %v730, %v732
        %743 = vadd.xlane.f32.xlu0 %v742
        %v744 = vpop.xlane.xlu0 %743
        %v745 = vlog2.pop %v735
        %v746 = vmul.f32 %v745, 0.6931472
        %v747 = vlog2.pop %v738
        %v748 = vmul.f32 %v747, 0.6931472
        %v749 = vlog2.pop %v741
        %v750 = vmul.f32 %v749, 0.6931472
        %v751 = vlog2.pop %v744
        %v752 = vmul.f32 %v751, 0.6931472
        %p753 = scmp.ge.s32.totalorder %s29, 2
        // Predicated region
        $region53: #{tpu_custom_call.1} parent=31 // pred_check
          %p754 = pneg %p753
        $region54: #{tpu_custom_call.1} parent=31 // pred_check_branch
          %756 = sbr.rel (%p754) target = $region56
        $region55: #{tpu_custom_call.1} parent=31 // pred_region
          %v757 = vld [vmem:[#allocation4] sm:$0x3]
          %s758 = scalar_lea.vmem [#allocation2], 128
          %v759 = vld [vmem:[%s758] sm:$0xff]
          %v760 = vld [vmem:[%s758 + $0x8] sm:$0xff]
          %v761 = vld [vmem:[%s758 + $0x10] sm:$0xff]
          %v762 = vld [vmem:[%s758 + $0x18] sm:$0xff]
          %v763 = vld [vmem:[%s758 + $0x20] sm:$0xff]
          %v764 = vld [vmem:[%s758 + $0x28] sm:$0xff]
          %v765 = vld [vmem:[%s758 + $0x30] sm:$0xff]
          %v766 = vld [vmem:[%s758 + $0x38] sm:$0xff]
          %v767 = vmul.f32 %v759, %v709
          %v768 = vmul.f32 %v760, %v710
          %v769 = vmul.f32 %v761, %v711
          %v770 = vmul.f32 %v762, %v712
          %v771 = vmul.f32 %v763, %v713
          %v772 = vmul.f32 %v764, %v714
          %v773 = vmul.f32 %v765, %v715
          %v774 = vmul.f32 %v766, %v716
          %v775 = vadd.f32 %v767, %v769
          %v776 = vadd.f32 %v775, %v771
          %v777 = vadd.f32 %v776, %v773
          %v778 = vrot.slane %v777, 4
          %v779 = vadd.f32 %v777, %v778
          %v780 = vrot.slane %v779, 2
          %v781 = vadd.f32 %v779, %v780
          %v782 = vrot.slane %v781, 1
          %v783 = vadd.f32 %v781, %v782
          %v784 = vadd.f32 %v768, %v770
          %v785 = vadd.f32 %v784, %v772
          %v786 = vadd.f32 %v785, %v774
          %v787 = vrot.slane %v786, 4
          %v788 = vadd.f32 %v786, %v787
          %v789 = vrot.slane %v788, 2
          %v790 = vadd.f32 %v788, %v789
          %v791 = vrot.slane %v790, 1
          %v792 = vadd.f32 %v790, %v791
          %v795 = vrot.slane %v792, 7
          %vm796 = vcmask 1040384
          %v797 = vsel %vm796, %v783, %v795
          %v799 = vadd.f32 %v757, %v797
          %v800 = vlaneseq
          %vm801 = vcmp.ge.s32.totalorder %v800, 0
          %vm802 = vcmp.lt.s32.totalorder %v800, 256
          %vm803 = vmand %vm801, %vm802
          %804 = vst.msk [vmem:[#allocation4] sm:$0x3] %vm803, %v799
          %v805 = vld [vmem:[#allocation5] sm:$0xff]
          %v806 = vld [vmem:[#allocation5 + $0x8] sm:$0xff]
          %v807 = vld [vmem:[#allocation5 + $0x10] sm:$0xff]
          %v808 = vld [vmem:[#allocation5 + $0x18] sm:$0xff]
          %v809 = vmul.f32 %v746, 2.0
          %v810 = vmul.f32 %v748, 2.0
          %v811 = vmul.f32 %v750, 2.0
          %v812 = vmul.f32 %v752, 2.0
          %v813 = vadd.f32 %v805, %v809
          %v814 = vadd.f32 %v806, %v810
          %v815 = vadd.f32 %v807, %v811
          %v816 = vadd.f32 %v808, %v812
          %vm817 = vcmask 7168
          %818 = vst.msk [vmem:[#allocation5] sm:$0xff] %vm817, %v813
          %819 = vst.msk [vmem:[#allocation5 + $0x8] sm:$0xff] %vm817, %v814
          %820 = vst.msk [vmem:[#allocation5 + $0x10] sm:$0xff] %vm817, %v815
          %821 = vst.msk [vmem:[#allocation5 + $0x18] sm:$0xff] %vm817, %v816
        $region56: #{tpu_custom_call.1} parent=31 // pred_fallthru
          _
        // Predicated region
        $region57: #{tpu_custom_call.1} parent=31 // pred_check
          %p822 = pneg %p290
        $region58: #{tpu_custom_call.1} parent=31 // pred_check_branch
          %824 = sbr.rel (%p822) target = $region60
        $region59: #{tpu_custom_call.1} parent=31 // pred_region
          %v825 = vld [vmem:[#allocation4] sm:$0x3]
          %s826 = scalar_lea.vmem [#allocation2], 64
          %v827 = vld [vmem:[%s826] sm:$0xff]
          %v828 = vld [vmem:[%s826 + $0x8] sm:$0xff]
          %v829 = vld [vmem:[%s826 + $0x10] sm:$0xff]
          %v830 = vld [vmem:[%s826 + $0x18] sm:$0xff]
          %v831 = vld [vmem:[%s826 + $0x20] sm:$0xff]
          %v832 = vld [vmem:[%s826 + $0x28] sm:$0xff]
          %v833 = vld [vmem:[%s826 + $0x30] sm:$0xff]
          %v834 = vld [vmem:[%s826 + $0x38] sm:$0xff]
          %v835 = vmul.f32 %v827, %v709
          %v836 = vmul.f32 %v828, %v710
          %v837 = vmul.f32 %v829, %v711
          %v838 = vmul.f32 %v830, %v712
          %v839 = vmul.f32 %v831, %v713
          %v840 = vmul.f32 %v832, %v714
          %v841 = vmul.f32 %v833, %v715
          %v842 = vmul.f32 %v834, %v716
          %v843 = vadd.f32 %v835, %v837
          %v844 = vadd.f32 %v843, %v839
          %v845 = vadd.f32 %v844, %v841
          %v846 = vrot.slane %v845, 4
          %v847 = vadd.f32 %v845, %v846
          %v848 = vrot.slane %v847, 2
          %v849 = vadd.f32 %v847, %v848
          %v850 = vrot.slane %v849, 1
          %v851 = vadd.f32 %v849, %v850
          %v852 = vadd.f32 %v836, %v838
          %v853 = vadd.f32 %v852, %v840
          %v854 = vadd.f32 %v853, %v842
          %v855 = vrot.slane %v854, 4
          %v856 = vadd.f32 %v854, %v855
          %v857 = vrot.slane %v856, 2
          %v858 = vadd.f32 %v856, %v857
          %v859 = vrot.slane %v858, 1
          %v860 = vadd.f32 %v858, %v859
          %v863 = vrot.slane %v860, 7
          %vm864 = vcmask 1040384
          %v865 = vsel %vm864, %v851, %v863
          %v867 = vadd.f32 %v825, %v865
          %v868 = vlaneseq
          %vm869 = vcmp.ge.s32.totalorder %v868, 0
          %vm870 = vcmp.lt.s32.totalorder %v868, 256
          %vm871 = vmand %vm869, %vm870
          %872 = vst.msk [vmem:[#allocation4] sm:$0x3] %vm871, %v867
          %v873 = vld [vmem:[#allocation5] sm:$0xff]
          %v874 = vld [vmem:[#allocation5 + $0x8] sm:$0xff]
          %v875 = vld [vmem:[#allocation5 + $0x10] sm:$0xff]
          %v876 = vld [vmem:[#allocation5 + $0x18] sm:$0xff]
          %v877 = vadd.f32 %v873, %v746
          %v878 = vadd.f32 %v874, %v748
          %v879 = vadd.f32 %v875, %v750
          %v880 = vadd.f32 %v876, %v752
          %vm881 = vcmask 7168
          %882 = vst.msk [vmem:[#allocation5] sm:$0xff] %vm881, %v877
          %883 = vst.msk [vmem:[#allocation5 + $0x8] sm:$0xff] %vm881, %v878
          %884 = vst.msk [vmem:[#allocation5 + $0x10] sm:$0xff] %vm881, %v879
          %885 = vst.msk [vmem:[#allocation5 + $0x18] sm:$0xff] %vm881, %v880
        $region60: #{tpu_custom_call.1} parent=31 // pred_fallthru
          _
        %p886 = scmp.eq.s32.totalorder %s29, 1
        // Predicated region
        $region61: #{tpu_custom_call.1} parent=31 // pred_check
          %p887 = pneg %p886
        $region62: #{tpu_custom_call.1} parent=31 // pred_check_branch
          %889 = sbr.rel (%p887) target = $region64
        $region63: #{tpu_custom_call.1} parent=31 // pred_region
          %v890 = vld [vmem:[#allocation4] sm:$0x3]
          %v891 = vld [vmem:[#allocation2] sm:$0xff]
          %v892 = vld [vmem:[#allocation2 + $0x8] sm:$0xff]
          %v893 = vld [vmem:[#allocation2 + $0x10] sm:$0xff]
          %v894 = vld [vmem:[#allocation2 + $0x18] sm:$0xff]
          %v895 = vld [vmem:[#allocation2 + $0x20] sm:$0xff]
          %v896 = vld [vmem:[#allocation2 + $0x28] sm:$0xff]
          %v897 = vld [vmem:[#allocation2 + $0x30] sm:$0xff]
          %v898 = vld [vmem:[#allocation2 + $0x38] sm:$0xff]
          %v899 = vmul.f32 %v891, %v709
          %v900 = vmul.f32 %v892, %v710
          %v901 = vmul.f32 %v893, %v711
          %v902 = vmul.f32 %v894, %v712
          %v903 = vmul.f32 %v895, %v713
          %v904 = vmul.f32 %v896, %v714
          %v905 = vmul.f32 %v897, %v715
          %v906 = vmul.f32 %v898, %v716
          %v907 = vadd.f32 %v899, %v901
          %v908 = vadd.f32 %v907, %v903
          %v909 = vadd.f32 %v908, %v905
          %v910 = vrot.slane %v909, 4
          %v911 = vadd.f32 %v909, %v910
          %v912 = vrot.slane %v911, 2
          %v913 = vadd.f32 %v911, %v912
          %v914 = vrot.slane %v913, 1
          %v915 = vadd.f32 %v913, %v914
          %v916 = vadd.f32 %v900, %v902
          %v917 = vadd.f32 %v916, %v904
          %v918 = vadd.f32 %v917, %v906
          %v919 = vrot.slane %v918, 4
          %v920 = vadd.f32 %v918, %v919
          %v921 = vrot.slane %v920, 2
          %v922 = vadd.f32 %v920, %v921
          %v923 = vrot.slane %v922, 1
          %v924 = vadd.f32 %v922, %v923
          %v927 = vrot.slane %v924, 7
          %vm928 = vcmask 1040384
          %v929 = vsel %vm928, %v915, %v927
          %v931 = vadd.f32 %v890, %v929
          %v932 = vlaneseq
          %vm933 = vcmp.ge.s32.totalorder %v932, 0
          %vm934 = vcmp.lt.s32.totalorder %v932, 256
          %vm935 = vmand %vm933, %vm934
          %936 = vst.msk [vmem:[#allocation4] sm:$0x3] %vm935, %v931
          %v937 = vld [vmem:[#allocation5] sm:$0xff]
          %v938 = vld [vmem:[#allocation5 + $0x8] sm:$0xff]
          %v939 = vld [vmem:[#allocation5 + $0x10] sm:$0xff]
          %v940 = vld [vmem:[#allocation5 + $0x18] sm:$0xff]
          %v941 = vadd.f32 %v937, %v746
          %v942 = vadd.f32 %v938, %v748
          %v943 = vadd.f32 %v939, %v750
          %v944 = vadd.f32 %v940, %v752
          %vm945 = vcmask 7168
          %946 = vst.msk [vmem:[#allocation5] sm:$0xff] %vm945, %v941
          %947 = vst.msk [vmem:[#allocation5 + $0x8] sm:$0xff] %vm945, %v942
          %948 = vst.msk [vmem:[#allocation5 + $0x10] sm:$0xff] %vm945, %v943
          %949 = vst.msk [vmem:[#allocation5 + $0x18] sm:$0xff] %vm945, %v944
        $region64: #{tpu_custom_call.1} parent=31 // pred_fallthru
          _
        %p950 = scmp.eq.s32.totalorder %s29, 3
        %p951 = pnand %p289, %p950
        %p952 = pneg %p951
        // Predicated region
        $region65: #{tpu_custom_call.1} parent=31 // pred_check
          _
        $region66: #{tpu_custom_call.1} parent=31 // pred_check_branch
          %954 = sbr.rel (%p951) target = $region68
        $region67: #{tpu_custom_call.1} parent=31 // pred_region
          %v955 = vld [vmem:[#allocation5] sm:$0xff]
          %v956 = vld [vmem:[#allocation5 + $0x8] sm:$0xff]
          %v957 = vld [vmem:[#allocation5 + $0x10] sm:$0xff]
          %v958 = vld [vmem:[#allocation5 + $0x18] sm:$0xff]
          %vm959 = vcmask 7168
          %v960 = vsel %vm959, %v955, 0.0
          %v961 = vsel %vm959, %v956, 0.0
          %v962 = vadd.f32 %v960, %v961
          %v963 = vsel %vm959, %v957, 0.0
          %v964 = vadd.f32 %v962, %v963
          %v965 = vsel %vm959, %v958, 0.0
          %v966 = vadd.f32 %v964, %v965
          %967 = vadd.xlane.f32.xlu0 %v966
          %v968 = vpop.xlane.xlu0 %967
          %v969 = vrot.slane %v968, 4
          %v970 = vadd.f32 %v968, %v969
          %v971 = vrot.slane %v970, 2
          %v972 = vadd.f32 %v970, %v971
          %v973 = vrot.slane %v972, 1
          %v974 = vadd.f32 %v972, %v973
          %s975 = vtos %v974
          %v976 = vld [vmem:[#allocation4] sm:$0x3]
          %v978 = vperm.slane %v976, 0
          %v979 = vperm.slane %v976, 1
          %vm982 = vcmask 1040384
          %v983 = vsel %vm982, %v978, 0.0
          %v984 = vsel %vm982, %v979, 0.0
          %v985 = vadd.f32 %v983, %v984
          %986 = vadd.xlane.f32.xlu0 %v985
          %v987 = vpop.xlane.xlu0 %986
          %v988 = vrot.slane %v987, 4
          %v989 = vadd.f32 %v987, %v988
          %v990 = vrot.slane %v989, 2
          %v991 = vadd.f32 %v989, %v990
          %v992 = vrot.slane %v991, 1
          %v993 = vadd.f32 %v991, %v992
          %s994 = vtos %v993
          %s995 = ssub.f32 %s975, %s994
          %v996 = vstv %s995
          %vm997 = vcmask 0
          %998 = vst.msk [vmem:[#allocation12] sm:$0x1] %vm997, %v996
          %v999 = vld [vmem:[#allocation3] sm:$0x3]
          %v1000 = vlaneseq
          %vm1001 = vcmp.ge.s32.totalorder %v1000, 0
          %vm1002 = vcmp.lt.s32.totalorder %v1000, 256
          %vm1003 = vmand %vm1001, %vm1002
          %1004 = vst.msk [vmem:[#allocation13] sm:$0x3] %vm1003, %v999
        $region68: #{tpu_custom_call.1} parent=31 // pred_fallthru
          _
        // Predicated region
        $region69: #{tpu_custom_call.1} parent=31 // pred_check
          %p1005 = pneg %p138
        $region70: #{tpu_custom_call.1} parent=31 // pred_check_branch
          %1007 = sbr.rel (%p1005) target = $region72
        $region71: #{tpu_custom_call.1} parent=31 // pred_region
          %1009 = vsyncadd [#allocation8], 0
          %s1010 = scalar_lea.hbm %s3, %s27
          %s1012 = sshll.u32 [#allocation12], 4
          %s1013 = int_to_ptr.vmem [resolvable:$true] %s1012
          %s1014 = sshll.u32 %s1010, 4
          %s1015 = int_to_ptr.hbm [resolvable:$true] %s1014
          %1017 = dma.vmem_to_hbm [thread:$0]  %s1013, 16, %s1015, [#allocation8]
        $region72: #{tpu_custom_call.1} parent=31 // pred_fallthru
          _
        // Predicated region
        $region73: #{tpu_custom_call.1} parent=31 // pred_check
          %p1018 = pneg %p164
        $region74: #{tpu_custom_call.1} parent=31 // pred_check_branch
          %1020 = sbr.rel (%p1018) target = $region76
        $region75: #{tpu_custom_call.1} parent=31 // pred_region
          %1022 = vsyncadd [#allocation14], 0
          %s1023 = smul.addr %s27, 2
          %s1024 = scalar_lea.hbm %s4, %s1023
          %s1026 = sshll.u32 [#allocation13], 4
          %s1027 = int_to_ptr.vmem [resolvable:$true] %s1026
          %s1028 = sshll.u32 %s1024, 4
          %s1029 = int_to_ptr.hbm [resolvable:$true] %s1028
          %1031 = dma.vmem_to_hbm [thread:$0]  %s1027, 32, %s1029, [#allocation14]
        $region76: #{tpu_custom_call.1} parent=31 // pred_fallthru
          _
        // Predicated region
        $region77: #{tpu_custom_call.1} parent=31 // pred_check
          %p1032 = pneg %p138
        $region78: #{tpu_custom_call.1} parent=31 // pred_check_branch
          %1034 = sbr.rel (%p1032) target = $region80
        $region79: #{tpu_custom_call.1} parent=31 // pred_region
          %1036 = dma.done [#allocation8], 16
        $region80: #{tpu_custom_call.1} parent=31 // pred_fallthru
          _
        // Predicated region
        $region81: #{tpu_custom_call.1} parent=31 // pred_check
          %p1037 = pneg %p164
        $region82: #{tpu_custom_call.1} parent=31 // pred_check_branch
          %1039 = sbr.rel (%p1037) target = $region84
        $region83: #{tpu_custom_call.1} parent=31 // pred_region
          %1041 = dma.done [#allocation14], 32
        $region84: #{tpu_custom_call.1} parent=31 // pred_fallthru
          _
      $region32: #{tpu_custom_call.1} parent=5 // pred_fallthru
        _
      %p1042 = scmp.le.s32.totalorder 2, %s17
      // Predicated region
      $region85: #{tpu_custom_call.1} parent=5 // pred_check
        %p1043 = pneg %p1042
      $region86: #{tpu_custom_call.1} parent=5 // pred_check_branch
        %1045 = sbr.rel (%p1043) target = $region88
      $region87: #{tpu_custom_call.1} parent=5 // pred_region
        %s1046 = ssub.s32 %s17, 2
      $region88: #{tpu_custom_call.1} parent=5 // pred_fallthru
        _
    $region6: #{tpu_custom_call.1} parent=1 // loop_footer
      %s21 = sadd.s32 1, %s17
    $region7: #{tpu_custom_call.1} parent=1 // loop_footer_branch
      %16 = sbr.rel target = $region3
    $region8: #{tpu_custom_call.1} parent=1 // loop_exit
      _
    %1047 = vsyncpa [#allocation7], 1
    %s1048 = scalar_lea.sflag [#allocation7], 1
    %1049 = vsyncpa %s1048, 1
    %1050 = vsyncpa [#allocation10], 1
    %1051 = vsyncpa [#allocation8], 1
    %s1052 = scalar_lea.sflag [#allocation8], 1
    %1053 = vsyncpa %s1052, 1
    %1054 = vsyncpa [#allocation14], 1

</llo_original>
